<compile_context>
chip_gen: v7x
topology: tpu7x:2x2x1
jax: 0.10.0
libtpu: 0.0.40
codegen_flags: <defaults>
</compile_context>

<pallas_src>
import math
from functools import partial

import jax
import jax.numpy as jnp
from jax import lax
from jax.experimental import pallas as pl
from jax.experimental.pallas import tpu as pltpu


def mha_kernel(q_ref, k_ref, v_ref,
               wq_ref, bq_ref, wk_ref, bk_ref, wv_ref, bv_ref,
               wo_ref, bo_ref,
               o_ref,
               k_cache, v_cache,
               *, n_heads, dim_q, dim_k, dim_in, compute_dtype, approx_recip):
    cd = compute_dtype
    tq = q_ref.shape[1]

    # ---- K/V projections: computed once per batch element (qi == 0) --------
    # The projected K/V live in persistent VMEM scratch; the qi grid axis is
    # "arbitrary" so the cache written at qi == 0 is reused for qi > 0.
    @pl.when(pl.program_id(1) == 0)
    def _():
        k_in = k_ref[0].astype(cd)                           # (S, dim_in)
        v_in = v_ref[0].astype(cd)
        k_all = jnp.dot(k_in, wk_ref[...],
                        preferred_element_type=jnp.float32) + bk_ref[...]
        v_all = jnp.dot(v_in, wv_ref[...],
                        preferred_element_type=jnp.float32) + bv_ref[...]
        k_cache[...] = k_all.astype(cd)                      # (S, H*dk)
        v_cache[...] = v_all.astype(cd)

    # ---- Per-query-tile work ------------------------------------------------
    # Fused lane-dense Q projection for all heads; 1/sqrt(dq) pre-folded
    # into wq/bq on the host.
    q_in = q_ref[0].astype(cd)                               # (tq, dim_in)
    q_all = (jnp.dot(q_in, wq_ref[...],
                     preferred_element_type=jnp.float32)
             + bq_ref[...]).astype(cd)                       # (tq, H*dq)

    # Decomposed output projection: accumulate head_h @ wo_t[h] into an f32
    # register accumulator -> one lane-dense 128-wide store at the end.
    acc = jnp.zeros((tq, dim_in), jnp.float32)
    for h in range(n_heads):                                 # static unroll
        q_h = q_all[:, h * dim_q:(h + 1) * dim_q]            # (tq, dq)
        k_h = k_cache[:, h * dim_k:(h + 1) * dim_k]          # (S,  dk)
        v_h = v_cache[:, h * dim_k:(h + 1) * dim_k]          # (S,  dk)

        # "NT" contraction: contract last axes directly (no k.T relayout).
        s = lax.dot_general(q_h, k_h, (((1,), (1,)), ((), ())),
                            preferred_element_type=jnp.float32)  # (tq, S) f32
        # Softmax statistics stay in f32.
        s = s - jnp.max(s, axis=-1, keepdims=True)
        p = jnp.exp(s)
        p = p * pl.reciprocal(jnp.sum(p, axis=-1, keepdims=True),
                              approx=approx_recip)
        pv = jnp.dot(p.astype(cd), v_h,
                     preferred_element_type=jnp.float32)         # (tq, dk) f32
        wo_h = wo_ref[h * dim_k:(h + 1) * dim_k, :]          # (dk, dim_in)
        acc = acc + jnp.dot(pv.astype(cd), wo_h,
                            preferred_element_type=jnp.float32)

    o_ref[0] = (acc + bo_ref[...]).astype(o_ref.dtype)


def multi_head_attention(query, key, value, params, *, tq=None,
                         compute_dtype=jnp.bfloat16):
    """query/key/value: (B, S, dim_in).  params in PyTorch nn.Linear layout."""
    B, S, dim_in = query.shape
    wq, bq = params["wq"], params["bq"]     # (H, dq, dim_in), (H, dq)
    wk, bk = params["wk"], params["bk"]     # (H, dk, dim_in), (H, dk)
    wv, bv = params["wv"], params["bv"]     # (H, dk, dim_in), (H, dk)
    wo, bo = params["wo"], params["bo"]     # (dim_in, H*dk),  (dim_in,)
    H, dim_q, _ = wq.shape
    dim_k = wk.shape[1]
    assert dim_q == dim_k, "scaled_dot_product_attention requires dim_q == dim_k"

    if tq is None:
        tq = min(S, 512)                     # larger tiles amortize grid-step cost
    assert S % tq == 0, "query tile must divide S"
    n_qt = S // tq

    # ---- Host-side weight prep (one-time transform) -------------------------
    scale = 1.0 / math.sqrt(dim_q)
    # nn.Linear computes x @ W^T + b; pre-transpose, stack heads on the lane
    # dim, fold the attention scale into the Q branch, and cast weights to the
    # MXU compute dtype on the host.  Biases stay f32 (added post-accumulate).
    wq_all = (jnp.transpose(wq, (2, 0, 1)).reshape(dim_in, H * dim_q)
              * scale).astype(compute_dtype)
    bq_all = (bq.reshape(1, H * dim_q) * scale).astype(jnp.float32)
    wk_all = jnp.transpose(wk, (2, 0, 1)).reshape(dim_in, H * dim_k).astype(compute_dtype)
    bk_all = bk.reshape(1, H * dim_k).astype(jnp.float32)
    wv_all = jnp.transpose(wv, (2, 0, 1)).reshape(dim_in, H * dim_k).astype(compute_dtype)
    bv_all = bv.reshape(1, H * dim_k).astype(jnp.float32)
    wo_t = jnp.transpose(wo).astype(compute_dtype)            # (H*dk, dim_in)
    bo_r = bo.reshape(1, dim_in).astype(jnp.float32)

    approx_recip = jnp.dtype(compute_dtype) != jnp.dtype(jnp.float32)

    # ---- Explicit VMEM budget (double-buffered blocks + persistent scratch) --
    in_b = query.dtype.itemsize
    cd_b = jnp.dtype(compute_dtype).itemsize
    est = (2 * tq * dim_in * in_b                                  # q blocks
           + 2 * 2 * S * dim_in * in_b                             # k + v blocks
           + 2 * tq * dim_in * query.dtype.itemsize                # out blocks
           + 2 * cd_b * (dim_in * H * dim_q + 2 * dim_in * H * dim_k
                         + H * dim_k * dim_in)                     # weights
           + 2 * 4 * (H * dim_q + 2 * H * dim_k + dim_in)          # biases
           + 2 * S * H * dim_k * cd_b                              # K/V caches
           + 2 * 4 * tq * S                                        # scores / probs
           + 4 * tq * dim_in)                                      # f32 accumulator
    vmem_limit = int(min(128 << 20, max(32 << 20, 2 * est)))

    kernel = partial(mha_kernel, n_heads=H, dim_q=dim_q, dim_k=dim_k,
                     dim_in=dim_in, compute_dtype=compute_dtype,
                     approx_recip=approx_recip)

    def full_block(shape):
        # Whole-array block, fetched once (block index never changes).
        return pl.BlockSpec(shape, lambda b, qi: (0, 0))

    out = pl.pallas_call(
        kernel,
        out_shape=jax.ShapeDtypeStruct((B, S, dim_in), query.dtype),
        grid_spec=pltpu.PrefetchScalarGridSpec(
            num_scalar_prefetch=0,
            grid=(B, n_qt),
            in_specs=[
                pl.BlockSpec((1, tq, dim_in), lambda b, qi: (b, qi, 0)),  # query tile
                pl.BlockSpec((1, S, dim_in), lambda b, qi: (b, 0, 0)),    # key (full S, per-b)
                pl.BlockSpec((1, S, dim_in), lambda b, qi: (b, 0, 0)),    # value (full S, per-b)
                full_block((dim_in, H * dim_q)),                          # wq_all
                full_block((1, H * dim_q)),                               # bq_all
                full_block((dim_in, H * dim_k)),                          # wk_all
                full_block((1, H * dim_k)),                               # bk_all
                full_block((dim_in, H * dim_k)),                          # wv_all
                full_block((1, H * dim_k)),                               # bv_all
                full_block((H * dim_k, dim_in)),                          # wo (transposed)
                full_block((1, dim_in)),                                  # bo
            ],
            out_specs=pl.BlockSpec((1, tq, dim_in), lambda b, qi: (b, qi, 0)),
            scratch_shapes=[
                pltpu.VMEM((S, H * dim_k), compute_dtype),   # projected K cache
                pltpu.VMEM((S, H * dim_k), compute_dtype),   # projected V cache
            ]),
        compiler_params=pltpu.CompilerParams(
            # batch axis parallel (feeds both v7x TCs); qi axis arbitrary so the
            # per-batch K/V cache written at qi == 0 is valid for later tiles.
            dimension_semantics=("parallel", "arbitrary"),
            vmem_limit_bytes=vmem_limit),
    )(query, key, value, wq_all, bq_all, wk_all, bk_all, wv_all, bv_all,
      wo_t, bo_r)
    return out


def init_params(key, n_heads, dim_in, dim_q, dim_k):
    """Parameters in PyTorch nn.Linear layout: weight = (out_features, in_features)."""
    ks = jax.random.split(key, 8)
    s = 0.1
    return {
        "wq": s * jax.random.normal(ks[0], (n_heads, dim_q, dim_in), jnp.float32),
        "bq": s * jax.random.normal(ks[1], (n_heads, dim_q), jnp.float32),
        "wk": s * jax.random.normal(ks[2], (n_heads, dim_k, dim_in), jnp.float32),
        "bk": s * jax.random.normal(ks[3], (n_heads, dim_k), jnp.float32),
        "wv": s * jax.random.normal(ks[4], (n_heads, dim_k, dim_in), jnp.float32),
        "bv": s * jax.random.normal(ks[5], (n_heads, dim_k), jnp.float32),
        "wo": s * jax.random.normal(ks[6], (dim_in, n_heads * dim_k), jnp.float32),
        "bo": s * jax.random.normal(ks[7], (dim_in,), jnp.float32),
    }


def reference(query, key, value, params):
    """Pure-JAX reference mirroring the PyTorch module semantics."""
    H = params["wq"].shape[0]
    outs = []
    for h in range(H):
        q = query @ params["wq"][h].T + params["bq"][h]
        k = key @ params["wk"][h].T + params["bk"][h]
        v = value @ params["wv"][h].T + params["bv"][h]
        d_k = q.shape[-1]
        scores = jnp.einsum("bqd,bkd->bqk", q, k) / math.sqrt(d_k)
        p = jax.nn.softmax(scores, axis=-1)
        outs.append(jnp.einsum("bqk,bkd->bqd", p, v))
    cat = jnp.concatenate(outs, axis=-1)
    return cat @ params["wo"].T + params["bo"]


if __name__ == "__main__":
    # Small but lane-dense config: dim_in = H*dim_q = H*dim_k = 128.
    B, S = 2, 16
    n_heads, dim_in, dim_q, dim_k = 4, 128, 32, 32

    key = jax.random.PRNGKey(0)
    kq, kk, kv, kp = jax.random.split(key, 4)
    query = jax.random.normal(kq, (B, S, dim_in), jnp.float32)
    k_in = jax.random.normal(kk, (B, S, dim_in), jnp.float32)
    v_in = jax.random.normal(kv, (B, S, dim_in), jnp.float32)
    params = init_params(kp, n_heads, dim_in, dim_q, dim_k)

    ref = reference(query, k_in, v_in, params)

    # Default bf16 MXU path; tq=8 exercises the multi-tile path (grid = (2, 2))
    # and the qi==0 K/V projection-caching branch.
    out_bf16 = jax.block_until_ready(
        multi_head_attention(query, k_in, v_in, params, tq=8))
    assert out_bf16.shape == (B, S, dim_in)
    assert jnp.allclose(out_bf16, ref, atol=5e-2, rtol=5e-2), "bf16 mismatch vs reference"

    # f32 compute path: strict check of kernel semantics vs the reference.
    out_f32 = jax.block_until_ready(
        multi_head_attention(query, k_in, v_in, params, tq=8,
                             compute_dtype=jnp.float32))
    assert jnp.allclose(out_f32, ref, atol=1e-3, rtol=1e-3), "f32 mismatch vs reference"

    print("KERNEL_OK")
</pallas_src>

<mosaic_0001>
module attributes {stable_mosaic.version = 11 : i64} {
  func.func @mha_kernel(%arg0: i32, %arg1: i32, %arg2: memref<1x8x128xf32, #tpu.memory_space<vmem>>, %arg3: memref<1x16x128xf32, #tpu.memory_space<vmem>>, %arg4: memref<1x16x128xf32, #tpu.memory_space<vmem>>, %arg5: memref<128x128xbf16, #tpu.memory_space<vmem>>, %arg6: memref<1x128xf32, #tpu.memory_space<vmem>>, %arg7: memref<128x128xbf16, #tpu.memory_space<vmem>>, %arg8: memref<1x128xf32, #tpu.memory_space<vmem>>, %arg9: memref<128x128xbf16, #tpu.memory_space<vmem>>, %arg10: memref<1x128xf32, #tpu.memory_space<vmem>>, %arg11: memref<128x128xbf16, #tpu.memory_space<vmem>>, %arg12: memref<1x128xf32, #tpu.memory_space<vmem>>, %arg13: memref<1x8x128xf32, #tpu.memory_space<vmem>>, %arg14: memref<16x128xbf16, #tpu.memory_space<vmem>>, %arg15: memref<16x128xbf16, #tpu.memory_space<vmem>>) attributes {dimension_semantics = [#tpu.dimension_semantics<parallel>, #tpu.dimension_semantics<arbitrary>], iteration_bounds = array<i64: 2, 2>, scalar_prefetch = 0 : i64, scratch_operands = 2 : i64, tpu.core_type = #tpu.core_type<tc>, window_params = [{transform_indices = @transform_0, window_bounds = array<i64: 1, 8, 128>}, {transform_indices = @transform_1, window_bounds = array<i64: 1, 16, 128>}, {transform_indices = @transform_2, window_bounds = array<i64: 1, 16, 128>}, {pipeline_mode = #tpu.pipeline_mode<synchronous>, transform_indices = @transform_3, window_bounds = array<i64: 128, 128>}, {pipeline_mode = #tpu.pipeline_mode<synchronous>, transform_indices = @transform_4, window_bounds = array<i64: 1, 128>}, {pipeline_mode = #tpu.pipeline_mode<synchronous>, transform_indices = @transform_5, window_bounds = array<i64: 128, 128>}, {pipeline_mode = #tpu.pipeline_mode<synchronous>, transform_indices = @transform_6, window_bounds = array<i64: 1, 128>}, {pipeline_mode = #tpu.pipeline_mode<synchronous>, transform_indices = @transform_7, window_bounds = array<i64: 128, 128>}, {pipeline_mode = #tpu.pipeline_mode<synchronous>, transform_indices = @transform_8, window_bounds = array<i64: 1, 128>}, {pipeline_mode = #tpu.pipeline_mode<synchronous>, transform_indices = @transform_9, window_bounds = array<i64: 128, 128>}, {pipeline_mode = #tpu.pipeline_mode<synchronous>, transform_indices = @transform_10, window_bounds = array<i64: 1, 128>}, {transform_indices = @transform_11, window_bounds = array<i64: 1, 8, 128>}]} {
    %c0_i32 = arith.constant 0 : i32
    %0 = arith.cmpi eq, %arg1, %c0_i32 : i32
    %1 = arith.extui %0 : i1 to i32
    %c0_i32_0 = arith.constant 0 : i32
    %2 = arith.cmpi ne, %1, %c0_i32_0 : i32
    scf.if %2 {
      %c0_54 = arith.constant 0 : index
      %c0_55 = arith.constant 0 : index
      %c0_56 = arith.constant 0 : index
      %99 = vector.load %arg3[%c0_54, %c0_55, %c0_56] : memref<1x16x128xf32, #tpu.memory_space<vmem>>, vector<1x16x128xf32>
      %100 = vector.shape_cast %99 : vector<1x16x128xf32> to vector<16x128xf32>
      %101 = arith.truncf %100 : vector<16x128xf32> to vector<16x128xbf16>
      %c0_57 = arith.constant 0 : index
      %c0_58 = arith.constant 0 : index
      %c0_59 = arith.constant 0 : index
      %102 = vector.load %arg4[%c0_57, %c0_58, %c0_59] : memref<1x16x128xf32, #tpu.memory_space<vmem>>, vector<1x16x128xf32>
      %103 = vector.shape_cast %102 : vector<1x16x128xf32> to vector<16x128xf32>
      %104 = arith.truncf %103 : vector<16x128xf32> to vector<16x128xbf16>
      %c0_60 = arith.constant 0 : index
      %c0_61 = arith.constant 0 : index
      %105 = vector.load %arg7[%c0_60, %c0_61] : memref<128x128xbf16, #tpu.memory_space<vmem>>, vector<128x128xbf16>
      %cst_62 = arith.constant dense<0.000000e+00> : vector<16x128xf32>
      %106 = tpu.matmul %101, %105, %cst_62 {dimension_numbers = #tpu.dot_dimension_numbers<[1], [0], [0], [1], [0, 0, 1, 1], [], []>} : vector<16x128xbf16>, vector<128x128xbf16>, vector<16x128xf32> -> vector<16x128xf32>
      %c0_63 = arith.constant 0 : index
      %c0_64 = arith.constant 0 : index
      %107 = vector.load %arg8[%c0_63, %c0_64] : memref<1x128xf32, #tpu.memory_space<vmem>>, vector<1x128xf32>
      %108 = vector.broadcast %107 : vector<1x128xf32> to vector<16x128xf32>
      %109 = arith.addf %106, %108 : vector<16x128xf32>
      %c0_65 = arith.constant 0 : index
      %c0_66 = arith.constant 0 : index
      %110 = vector.load %arg9[%c0_65, %c0_66] : memref<128x128xbf16, #tpu.memory_space<vmem>>, vector<128x128xbf16>
      %cst_67 = arith.constant dense<0.000000e+00> : vector<16x128xf32>
      %111 = tpu.matmul %104, %110, %cst_67 {dimension_numbers = #tpu.dot_dimension_numbers<[1], [0], [0], [1], [0, 0, 1, 1], [], []>} : vector<16x128xbf16>, vector<128x128xbf16>, vector<16x128xf32> -> vector<16x128xf32>
      %c0_68 = arith.constant 0 : index
      %c0_69 = arith.constant 0 : index
      %112 = vector.load %arg10[%c0_68, %c0_69] : memref<1x128xf32, #tpu.memory_space<vmem>>, vector<1x128xf32>
      %113 = vector.broadcast %112 : vector<1x128xf32> to vector<16x128xf32>
      %114 = arith.addf %111, %113 : vector<16x128xf32>
      %115 = arith.truncf %109 : vector<16x128xf32> to vector<16x128xbf16>
      %c0_70 = arith.constant 0 : index
      %c0_71 = arith.constant 0 : index
      %116 = vector.load %arg14[%c0_70, %c0_71] : memref<16x128xbf16, #tpu.memory_space<vmem>>, vector<16x128xbf16>
      tpu.vector_store %arg14[%c0_70, %c0_71], %115 {strides = array<i32>} : memref<16x128xbf16, #tpu.memory_space<vmem>>, vector<16x128xbf16>,
      %117 = arith.truncf %114 : vector<16x128xf32> to vector<16x128xbf16>
      %c0_72 = arith.constant 0 : index
      %c0_73 = arith.constant 0 : index
      %118 = vector.load %arg15[%c0_72, %c0_73] : memref<16x128xbf16, #tpu.memory_space<vmem>>, vector<16x128xbf16>
      tpu.vector_store %arg15[%c0_72, %c0_73], %117 {strides = array<i32>} : memref<16x128xbf16, #tpu.memory_space<vmem>>, vector<16x128xbf16>,
    } else {
    }
    %c0 = arith.constant 0 : index
    %c0_1 = arith.constant 0 : index
    %c0_2 = arith.constant 0 : index
    %3 = vector.load %arg2[%c0, %c0_1, %c0_2] : memref<1x8x128xf32, #tpu.memory_space<vmem>>, vector<1x8x128xf32>
    %4 = vector.shape_cast %3 : vector<1x8x128xf32> to vector<8x128xf32>
    %5 = arith.truncf %4 : vector<8x128xf32> to vector<8x128xbf16>
    %c0_3 = arith.constant 0 : index
    %c0_4 = arith.constant 0 : index
    %6 = vector.load %arg5[%c0_3, %c0_4] : memref<128x128xbf16, #tpu.memory_space<vmem>>, vector<128x128xbf16>
    %cst = arith.constant dense<0.000000e+00> : vector<8x128xf32>
    %7 = tpu.matmul %5, %6, %cst {dimension_numbers = #tpu.dot_dimension_numbers<[1], [0], [0], [1], [0, 0, 1, 1], [], []>} : vector<8x128xbf16>, vector<128x128xbf16>, vector<8x128xf32> -> vector<8x128xf32>
    %c0_5 = arith.constant 0 : index
    %c0_6 = arith.constant 0 : index
    %8 = vector.load %arg6[%c0_5, %c0_6] : memref<1x128xf32, #tpu.memory_space<vmem>>, vector<1x128xf32>
    %9 = vector.broadcast %8 : vector<1x128xf32> to vector<8x128xf32>
    %10 = arith.addf %7, %9 : vector<8x128xf32>
    %11 = arith.truncf %10 : vector<8x128xf32> to vector<8x128xbf16>
    %cst_7 = arith.constant 0.000000e+00 : f32
    %12 = vector.broadcast %cst_7 : f32 to vector<8x128xf32>
    %13 = vector.extract_strided_slice %11 {offsets = [0, 0], sizes = [8, 32], strides = [1, 1]} : vector<8x128xbf16> to vector<8x32xbf16>
    %c0_8 = arith.constant 0 : index
    %c0_9 = arith.constant 0 : index
    %14 = vector.load %arg14[%c0_8, %c0_9] : memref<16x128xbf16, #tpu.memory_space<vmem>>, vector<16x32xbf16>
    %c0_10 = arith.constant 0 : index
    %c0_11 = arith.constant 0 : index
    %15 = vector.load %arg15[%c0_10, %c0_11] : memref<16x128xbf16, #tpu.memory_space<vmem>>, vector<16x32xbf16>
    %cst_12 = arith.constant dense<0.000000e+00> : vector<8x16xf32>
    %16 = tpu.matmul %13, %14, %cst_12 {dimension_numbers = #tpu.dot_dimension_numbers<[1], [1], [0], [0], [0, 0, 1, 0], [], []>} : vector<8x32xbf16>, vector<16x32xbf16>, vector<8x16xf32> -> vector<8x16xf32>
    %cst_13 = arith.constant dense<0xFF800000> : vector<8xf32>
    %17 = vector.multi_reduction <maximumf>, %16, %cst_13 [1] : vector<8x16xf32> to vector<8xf32>
    %18 = vector.shape_cast %17 : vector<8xf32> to vector<8x1xf32>
    %19 = vector.broadcast %18 : vector<8x1xf32> to vector<8x16xf32>
    %20 = arith.subf %16, %19 : vector<8x16xf32>
    %21 = math.exp %20 : vector<8x16xf32>
    %cst_14 = arith.constant dense<0.000000e+00> : vector<8xf32>
    %22 = vector.multi_reduction <add>, %21, %cst_14 [1] : vector<8x16xf32> to vector<8xf32>
    %23 = vector.shape_cast %22 : vector<8xf32> to vector<8x1xf32>
    %24 = tpu.reciprocal %23 {approx = true} : vector<8x1xf32> -> vector<8x1xf32>
    %25 = vector.broadcast %24 : vector<8x1xf32> to vector<8x16xf32>
    %26 = arith.mulf %21, %25 : vector<8x16xf32>
    %27 = arith.truncf %26 : vector<8x16xf32> to vector<8x16xbf16>
    %cst_15 = arith.constant dense<0.000000e+00> : vector<8x32xf32>
    %28 = tpu.matmul %27, %15, %cst_15 {dimension_numbers = #tpu.dot_dimension_numbers<[1], [0], [0], [1], [0, 0, 1, 1], [], []>} : vector<8x16xbf16>, vector<16x32xbf16>, vector<8x32xf32> -> vector<8x32xf32>
    %c0_16 = arith.constant 0 : index
    %c0_17 = arith.constant 0 : index
    %29 = vector.load %arg11[%c0_16, %c0_17] : memref<128x128xbf16, #tpu.memory_space<vmem>>, vector<32x128xbf16>
    %30 = arith.truncf %28 : vector<8x32xf32> to vector<8x32xbf16>
    %cst_18 = arith.constant dense<0.000000e+00> : vector<8x128xf32>
    %31 = tpu.matmul %30, %29, %cst_18 {dimension_numbers = #tpu.dot_dimension_numbers<[1], [0], [0], [1], [0, 0, 1, 1], [], []>} : vector<8x32xbf16>, vector<32x128xbf16>, vector<8x128xf32> -> vector<8x128xf32>
    %32 = arith.addf %12, %31 : vector<8x128xf32>
    %33 = vector.extract_strided_slice %11 {offsets = [0, 32], sizes = [8, 32], strides = [1, 1]} : vector<8x128xbf16> to vector<8x32xbf16>
    %c0_19 = arith.constant 0 : index
    %c32 = arith.constant 32 : index
    %34 = vector.load %arg14[%c0_19, %c32] : memref<16x128xbf16, #tpu.memory_space<vmem>>, vector<16x32xbf16>
    %c0_20 = arith.constant 0 : index
    %c32_21 = arith.constant 32 : index
    %35 = vector.load %arg15[%c0_20, %c32_21] : memref<16x128xbf16, #tpu.memory_space<vmem>>, vector<16x32xbf16>
    %cst_22 = arith.constant dense<0.000000e+00> : vector<8x16xf32>
    %36 = tpu.matmul %33, %34, %cst_22 {dimension_numbers = #tpu.dot_dimension_numbers<[1], [1], [0], [0], [0, 0, 1, 0], [], []>} : vector<8x32xbf16>, vector<16x32xbf16>, vector<8x16xf32> -> vector<8x16xf32>
    %cst_23 = arith.constant dense<0xFF800000> : vector<8xf32>
    %37 = vector.multi_reduction <maximumf>, %36, %cst_23 [1] : vector<8x16xf32> to vector<8xf32>
    %38 = vector.shape_cast %37 : vector<8xf32> to vector<8x1xf32>
    %39 = vector.broadcast %38 : vector<8x1xf32> to vector<8x16xf32>
    %40 = arith.subf %36, %39 : vector<8x16xf32>
    %41 = math.exp %40 : vector<8x16xf32>
    %cst_24 = arith.constant dense<0.000000e+00> : vector<8xf32>
    %42 = vector.multi_reduction <add>, %41, %cst_24 [1] : vector<8x16xf32> to vector<8xf32>
    %43 = vector.shape_cast %42 : vector<8xf32> to vector<8x1xf32>
    %44 = tpu.reciprocal %43 {approx = true} : vector<8x1xf32> -> vector<8x1xf32>
    %45 = vector.broadcast %44 : vector<8x1xf32> to vector<8x16xf32>
    %46 = arith.mulf %41, %45 : vector<8x16xf32>
    %47 = arith.truncf %46 : vector<8x16xf32> to vector<8x16xbf16>
    %cst_25 = arith.constant dense<0.000000e+00> : vector<8x32xf32>
    %48 = tpu.matmul %47, %35, %cst_25 {dimension_numbers = #tpu.dot_dimension_numbers<[1], [0], [0], [1], [0, 0, 1, 1], [], []>} : vector<8x16xbf16>, vector<16x32xbf16>, vector<8x32xf32> -> vector<8x32xf32>
    %c32_26 = arith.constant 32 : index
    %c0_27 = arith.constant 0 : index
    %49 = vector.load %arg11[%c32_26, %c0_27] : memref<128x128xbf16, #tpu.memory_space<vmem>>, vector<32x128xbf16>
    %50 = arith.truncf %48 : vector<8x32xf32> to vector<8x32xbf16>
    %cst_28 = arith.constant dense<0.000000e+00> : vector<8x128xf32>
    %51 = tpu.matmul %50, %49, %cst_28 {dimension_numbers = #tpu.dot_dimension_numbers<[1], [0], [0], [1], [0, 0, 1, 1], [], []>} : vector<8x32xbf16>, vector<32x128xbf16>, vector<8x128xf32> -> vector<8x128xf32>
    %52 = arith.addf %32, %51 : vector<8x128xf32>
    %53 = vector.extract_strided_slice %11 {offsets = [0, 64], sizes = [8, 32], strides = [1, 1]} : vector<8x128xbf16> to vector<8x32xbf16>
    %c0_29 = arith.constant 0 : index
    %c64 = arith.constant 64 : index
    %54 = vector.load %arg14[%c0_29, %c64] : memref<16x128xbf16, #tpu.memory_space<vmem>>, vector<16x32xbf16>
    %c0_30 = arith.constant 0 : index
    %c64_31 = arith.constant 64 : index
    %55 = vector.load %arg15[%c0_30, %c64_31] : memref<16x128xbf16, #tpu.memory_space<vmem>>, vector<16x32xbf16>
    %cst_32 = arith.constant dense<0.000000e+00> : vector<8x16xf32>
    %56 = tpu.matmul %53, %54, %cst_32 {dimension_numbers = #tpu.dot_dimension_numbers<[1], [1], [0], [0], [0, 0, 1, 0], [], []>} : vector<8x32xbf16>, vector<16x32xbf16>, vector<8x16xf32> -> vector<8x16xf32>
    %cst_33 = arith.constant dense<0xFF800000> : vector<8xf32>
    %57 = vector.multi_reduction <maximumf>, %56, %cst_33 [1] : vector<8x16xf32> to vector<8xf32>
    %58 = vector.shape_cast %57 : vector<8xf32> to vector<8x1xf32>
    %59 = vector.broadcast %58 : vector<8x1xf32> to vector<8x16xf32>
    %60 = arith.subf %56, %59 : vector<8x16xf32>
    %61 = math.exp %60 : vector<8x16xf32>
    %cst_34 = arith.constant dense<0.000000e+00> : vector<8xf32>
    %62 = vector.multi_reduction <add>, %61, %cst_34 [1] : vector<8x16xf32> to vector<8xf32>
    %63 = vector.shape_cast %62 : vector<8xf32> to vector<8x1xf32>
    %64 = tpu.reciprocal %63 {approx = true} : vector<8x1xf32> -> vector<8x1xf32>
    %65 = vector.broadcast %64 : vector<8x1xf32> to vector<8x16xf32>
    %66 = arith.mulf %61, %65 : vector<8x16xf32>
    %67 = arith.truncf %66 : vector<8x16xf32> to vector<8x16xbf16>
    %cst_35 = arith.constant dense<0.000000e+00> : vector<8x32xf32>
    %68 = tpu.matmul %67, %55, %cst_35 {dimension_numbers = #tpu.dot_dimension_numbers<[1], [0], [0], [1], [0, 0, 1, 1], [], []>} : vector<8x16xbf16>, vector<16x32xbf16>, vector<8x32xf32> -> vector<8x32xf32>
    %c64_36 = arith.constant 64 : index
    %c0_37 = arith.constant 0 : index
    %69 = vector.load %arg11[%c64_36, %c0_37] : memref<128x128xbf16, #tpu.memory_space<vmem>>, vector<32x128xbf16>
    %70 = arith.truncf %68 : vector<8x32xf32> to vector<8x32xbf16>
    %cst_38 = arith.constant dense<0.000000e+00> : vector<8x128xf32>
    %71 = tpu.matmul %70, %69, %cst_38 {dimension_numbers = #tpu.dot_dimension_numbers<[1], [0], [0], [1], [0, 0, 1, 1], [], []>} : vector<8x32xbf16>, vector<32x128xbf16>, vector<8x128xf32> -> vector<8x128xf32>
    %72 = arith.addf %52, %71 : vector<8x128xf32>
    %73 = vector.extract_strided_slice %11 {offsets = [0, 96], sizes = [8, 32], strides = [1, 1]} : vector<8x128xbf16> to vector<8x32xbf16>
    %c0_39 = arith.constant 0 : index
    %c96 = arith.constant 96 : index
    %74 = vector.load %arg14[%c0_39, %c96] : memref<16x128xbf16, #tpu.memory_space<vmem>>, vector<16x32xbf16>
    %c0_40 = arith.constant 0 : index
    %c96_41 = arith.constant 96 : index
    %75 = vector.load %arg15[%c0_40, %c96_41] : memref<16x128xbf16, #tpu.memory_space<vmem>>, vector<16x32xbf16>
    %cst_42 = arith.constant dense<0.000000e+00> : vector<8x16xf32>
    %76 = tpu.matmul %73, %74, %cst_42 {dimension_numbers = #tpu.dot_dimension_numbers<[1], [1], [0], [0], [0, 0, 1, 0], [], []>} : vector<8x32xbf16>, vector<16x32xbf16>, vector<8x16xf32> -> vector<8x16xf32>
    %cst_43 = arith.constant dense<0xFF800000> : vector<8xf32>
    %77 = vector.multi_reduction <maximumf>, %76, %cst_43 [1] : vector<8x16xf32> to vector<8xf32>
    %78 = vector.shape_cast %77 : vector<8xf32> to vector<8x1xf32>
    %79 = vector.broadcast %78 : vector<8x1xf32> to vector<8x16xf32>
    %80 = arith.subf %76, %79 : vector<8x16xf32>
    %81 = math.exp %80 : vector<8x16xf32>
    %cst_44 = arith.constant dense<0.000000e+00> : vector<8xf32>
    %82 = vector.multi_reduction <add>, %81, %cst_44 [1] : vector<8x16xf32> to vector<8xf32>
    %83 = vector.shape_cast %82 : vector<8xf32> to vector<8x1xf32>
    %84 = tpu.reciprocal %83 {approx = true} : vector<8x1xf32> -> vector<8x1xf32>
    %85 = vector.broadcast %84 : vector<8x1xf32> to vector<8x16xf32>
    %86 = arith.mulf %81, %85 : vector<8x16xf32>
    %87 = arith.truncf %86 : vector<8x16xf32> to vector<8x16xbf16>
    %cst_45 = arith.constant dense<0.000000e+00> : vector<8x32xf32>
    %88 = tpu.matmul %87, %75, %cst_45 {dimension_numbers = #tpu.dot_dimension_numbers<[1], [0], [0], [1], [0, 0, 1, 1], [], []>} : vector<8x16xbf16>, vector<16x32xbf16>, vector<8x32xf32> -> vector<8x32xf32>
    %c96_46 = arith.constant 96 : index
    %c0_47 = arith.constant 0 : index
    %89 = vector.load %arg11[%c96_46, %c0_47] : memref<128x128xbf16, #tpu.memory_space<vmem>>, vector<32x128xbf16>
    %90 = arith.truncf %88 : vector<8x32xf32> to vector<8x32xbf16>
    %cst_48 = arith.constant dense<0.000000e+00> : vector<8x128xf32>
    %91 = tpu.matmul %90, %89, %cst_48 {dimension_numbers = #tpu.dot_dimension_numbers<[1], [0], [0], [1], [0, 0, 1, 1], [], []>} : vector<8x32xbf16>, vector<32x128xbf16>, vector<8x128xf32> -> vector<8x128xf32>
    %92 = arith.addf %72, %91 : vector<8x128xf32>
    %c0_49 = arith.constant 0 : index
    %c0_50 = arith.constant 0 : index
    %93 = vector.load %arg12[%c0_49, %c0_50] : memref<1x128xf32, #tpu.memory_space<vmem>>, vector<1x128xf32>
    %94 = vector.broadcast %93 : vector<1x128xf32> to vector<8x128xf32>
    %95 = arith.addf %92, %94 : vector<8x128xf32>
    %c0_51 = arith.constant 0 : index
    %c0_52 = arith.constant 0 : index
    %c0_53 = arith.constant 0 : index
    %96 = vector.load %arg13[%c0_51, %c0_52, %c0_53] : memref<1x8x128xf32, #tpu.memory_space<vmem>>, vector<1x8x128xf32>
    %97 = vector.shape_cast %96 : vector<1x8x128xf32> to vector<8x128xf32>
    %98 = vector.shape_cast %95 : vector<8x128xf32> to vector<1x8x128xf32>
    tpu.vector_store %arg13[%c0_51, %c0_52, %c0_53], %98 {strides = array<i32>} : memref<1x8x128xf32, #tpu.memory_space<vmem>>, vector<1x8x128xf32>,
    return
  }
  func.func @transform_0(%arg0: i32, %arg1: i32) -> (i32, i32, i32) {
    %c0_i32 = arith.constant 0 : i32
    %c0_i32_0 = arith.constant 0 : i32
    return %arg0, %arg1, %c0_i32 : i32, i32, i32
  }
  func.func @transform_1(%arg0: i32, %arg1: i32) -> (i32, i32, i32) {
    %c0_i32 = arith.constant 0 : i32
    %c0_i32_0 = arith.constant 0 : i32
    %c0_i32_1 = arith.constant 0 : i32
    return %arg0, %c0_i32, %c0_i32_0 : i32, i32, i32
  }
  func.func @transform_2(%arg0: i32, %arg1: i32) -> (i32, i32, i32) {
    %c0_i32 = arith.constant 0 : i32
    %c0_i32_0 = arith.constant 0 : i32
    %c0_i32_1 = arith.constant 0 : i32
    return %arg0, %c0_i32, %c0_i32_0 : i32, i32, i32
  }
  func.func @transform_3(%arg0: i32, %arg1: i32) -> (i32, i32) {
    %c0_i32 = arith.constant 0 : i32
    %c0_i32_0 = arith.constant 0 : i32
    %c0_i32_1 = arith.constant 0 : i32
    return %c0_i32, %c0_i32_0 : i32, i32
  }
  func.func @transform_4(%arg0: i32, %arg1: i32) -> (i32, i32) {
    %c0_i32 = arith.constant 0 : i32
    %c0_i32_0 = arith.constant 0 : i32
    %c0_i32_1 = arith.constant 0 : i32
    return %c0_i32, %c0_i32_0 : i32, i32
  }
  func.func @transform_5(%arg0: i32, %arg1: i32) -> (i32, i32) {
    %c0_i32 = arith.constant 0 : i32
    %c0_i32_0 = arith.constant 0 : i32
    %c0_i32_1 = arith.constant 0 : i32
    return %c0_i32, %c0_i32_0 : i32, i32
  }
  func.func @transform_6(%arg0: i32, %arg1: i32) -> (i32, i32) {
    %c0_i32 = arith.constant 0 : i32
    %c0_i32_0 = arith.constant 0 : i32
    %c0_i32_1 = arith.constant 0 : i32
    return %c0_i32, %c0_i32_0 : i32, i32
  }
  func.func @transform_7(%arg0: i32, %arg1: i32) -> (i32, i32) {
    %c0_i32 = arith.constant 0 : i32
    %c0_i32_0 = arith.constant 0 : i32
    %c0_i32_1 = arith.constant 0 : i32
    return %c0_i32, %c0_i32_0 : i32, i32
  }
  func.func @transform_8(%arg0: i32, %arg1: i32) -> (i32, i32) {
    %c0_i32 = arith.constant 0 : i32
    %c0_i32_0 = arith.constant 0 : i32
    %c0_i32_1 = arith.constant 0 : i32
    return %c0_i32, %c0_i32_0 : i32, i32
  }
  func.func @transform_9(%arg0: i32, %arg1: i32) -> (i32, i32) {
    %c0_i32 = arith.constant 0 : i32
    %c0_i32_0 = arith.constant 0 : i32
    %c0_i32_1 = arith.constant 0 : i32
    return %c0_i32, %c0_i32_0 : i32, i32
  }
  func.func @transform_10(%arg0: i32, %arg1: i32) -> (i32, i32) {
    %c0_i32 = arith.constant 0 : i32
    %c0_i32_0 = arith.constant 0 : i32
    %c0_i32_1 = arith.constant 0 : i32
    return %c0_i32, %c0_i32_0 : i32, i32
  }
  func.func @transform_11(%arg0: i32, %arg1: i32) -> (i32, i32, i32) {
    %c0_i32 = arith.constant 0 : i32
    %c0_i32_0 = arith.constant 0 : i32
    return %arg0, %arg1, %c0_i32 : i32, i32, i32
  }
}

</mosaic_0001>

<llo_original>
// kernel: tpu_custom_call.1
$region0: #{tpu_custom_call.1}
  #allocation0 [shape = 'u32[]', space=smem, size = 0x4, offset = 0x4, fixed_abs, tag = 'smem constant byte address 0x4 - core index']
  #allocation1 [shape = 'u32[144,128]{1,0:T(1,128)}', space=vmem, size = 0x12000, scoped, tag = 'internal scratch']
  #allocation2 [shape = 'bf16[16,128]{1,0:T(16,128)(2,1)}', space=vmem, size = 0x1000, scoped, tag = 'scratch operand']
  #allocation3 [shape = 'bf16[16,128]{1,0:T(16,128)(2,1)}', space=vmem, size = 0x1000, scoped, tag = 'scratch operand']
  %s0 = inlined_call_operand.hbm [shape: f32[2,16,128], index: 0, kind: input, shape index: {}]
  %s1 = inlined_call_operand.hbm [shape: f32[2,16,128], index: 1, kind: input, shape index: {}]
  %s2 = inlined_call_operand.hbm [shape: f32[2,16,128], index: 2, kind: input, shape index: {}]
  %s3 = inlined_call_operand.hbm [shape: bf16[128,128], index: 3, kind: input, shape index: {}]
  %s4 = inlined_call_operand.vmem [shape: f32[1,128], index: 4, kind: input, shape index: {}]
  %s5 = inlined_call_operand.hbm [shape: bf16[128,128], index: 5, kind: input, shape index: {}]
  %s6 = inlined_call_operand.vmem [shape: f32[1,128], index: 6, kind: input, shape index: {}]
  %s7 = inlined_call_operand.hbm [shape: bf16[128,128], index: 7, kind: input, shape index: {}]
  %s8 = inlined_call_operand.vmem [shape: f32[1,128], index: 8, kind: input, shape index: {}]
  %s9 = inlined_call_operand.hbm [shape: bf16[128,128], index: 9, kind: input, shape index: {}]
  %s10 = inlined_call_operand.vmem [shape: f32[1,128], index: 10, kind: input, shape index: {}]
  %s11 = inlined_call_operand.hbm [shape: f32[2,16,128], index: 11, kind: output, shape index: {}]
  %s12 = sld [smem:[#allocation0]]
  $region109: #{tpu_custom_call.1} parent=0
    _
  %s14 = ssub.s32 1, %s12
  %s15 = scalar_select 0, %s14, %s12
  $region1: #{tpu_custom_call.1} parent=0
    #allocation4 [shape = 'u8[8192]{0}', space=vmem, size = 0x2000, scoped, tag = 'input window, operand 0']
    #allocation5 [shape = 's32[2]{0}', space=sflag, size = 0x8, scoped, tag = 'scoped memory for tpu_custom_call.1']
    #allocation6 [shape = 's32[2]{0}', space=sflag, size = 0x8, scoped, tag = 'scoped memory for tpu_custom_call.1']
    #allocation7 [shape = 'u8[16384]{0}', space=vmem, size = 0x4000, scoped, tag = 'input window, operand 1']
    #allocation8 [shape = 's32[2]{0}', space=sflag, size = 0x8, scoped, tag = 'scoped memory for tpu_custom_call.1']
    #allocation9 [shape = 'u8[16384]{0}', space=vmem, size = 0x4000, scoped, tag = 'input window, operand 2']
    #allocation10 [shape = 'u8[32768]{0}', space=vmem, size = 0x8000, scoped, tag = 'input window, operand 3, single buffered']
    #allocation11 [shape = 's32[1]{0}', space=sflag, size = 0x4, scoped, tag = 'scoped memory for tpu_custom_call.1']
    #allocation12 [shape = 'u8[32768]{0}', space=vmem, size = 0x8000, scoped, tag = 'input window, operand 5, single buffered']
    #allocation13 [shape = 'u8[32768]{0}', space=vmem, size = 0x8000, scoped, tag = 'input window, operand 7, single buffered']
    #allocation14 [shape = 's32[1]{0}', space=sflag, size = 0x4, scoped, tag = 'scoped memory for tpu_custom_call.1']
    #allocation15 [shape = 'u8[32768]{0}', space=vmem, size = 0x8000, scoped, tag = 'input window, operand 9, single buffered']
    #allocation16 [shape = 'u8[8192]{0}', space=vmem, size = 0x2000, scoped, tag = 'output window, operand 0']
    %16 = vsyncpa [#allocation5], 0
    %s17 = scalar_lea.sflag [#allocation5], 1
    %18 = vsyncpa %s17, 0
    %19 = vsyncpa [#allocation8], 0
    %s20 = scalar_lea.sflag [#allocation8], 1
    %21 = vsyncpa %s20, 0
    %22 = vsyncpa [#allocation11], 0
    %23 = vsyncpa [#allocation14], 0
    %24 = vsyncpa [#allocation6], 0
    %s25 = scalar_lea.sflag [#allocation6], 1
    %26 = vsyncpa %s25, 0
    loop: start=0, step=1, limit=6
    $region2: #{tpu_custom_call.1} parent=1 // loop_pre_header
      _
    $region3: #{tpu_custom_call.1} parent=1 // loop_header
      %s28 = sphi 0, %s32
      %p29 = scmp.ge.s32.totalorder %s28, 6
      %s35 = sphi 0, %s47
      %s36 = sphi 0, %s43
      %s37 = sphi 0, %s35
      %s38 = sphi 0, %s36
      %s39 = sphi 0, %s37
      %s40 = sphi 0, %s38
      %s52 = sphi 0, %s54
      %s55 = sphi 0, %s52
      %s56 = sphi 0, %s55
      %s72 = sphi 0, %s56
      %s78 = sphi 0, %s80
      %s81 = sphi 0, %s78
      %s82 = sphi 0, %s81
      %s98 = sphi 0, %s82
      %s104 = sphi 0, %s106
      %s107 = sphi 0, %s104
      %s108 = sphi 0, %s107
      %s124 = sphi 0, %s108
      %s128 = sphi 0, %s128
      %s130 = sphi 0, %s128
      %s131 = sphi 0, %s130
      %s145 = sphi 0, %s131
      %s149 = sphi 0, %s149
      %s151 = sphi 0, %s149
      %s152 = sphi 0, %s151
      %s166 = sphi 0, %s152
      %s170 = sphi 0, %s170
      %s172 = sphi 0, %s170
      %s173 = sphi 0, %s172
      %s187 = sphi 0, %s173
      %s191 = sphi 0, %s191
      %s193 = sphi 0, %s191
      %s194 = sphi 0, %s193
      %s208 = sphi 0, %s194
      %s212 = sphi 0, %s212
      %s214 = sphi 0, %s212
      %s215 = sphi 0, %s214
      %s229 = sphi 0, %s215
      %s233 = sphi 0, %s233
      %s235 = sphi 0, %s233
      %s236 = sphi 0, %s235
      %s250 = sphi 0, %s236
      %s254 = sphi 0, %s254
      %s256 = sphi 0, %s254
      %s257 = sphi 0, %s256
      %s271 = sphi 0, %s257
      %s275 = sphi 0, %s275
      %s277 = sphi 0, %s275
      %s278 = sphi 0, %s277
      %s292 = sphi 0, %s278
      %s300 = sphi 0, %s302
      %s303 = sphi 0, %s300
      %s304 = sphi 0, %s303
      %s320 = sphi 0, %s304
    $region4: #{tpu_custom_call.1} parent=1 // loop_header_branch
      %31 = sbr.rel (%p29) target = $region8
    $region5: #{tpu_custom_call.1} parent=1 // loop_body
      %s33 = ssub.s32 %s28, 1
      %s34 = ssub.s32 %s28, 2
      %s41 = sadd.s32 1, %s36
      %p42 = scmp.ge.s32.totalorder %s41, 2
      %s43 = scalar_select %p42, 0, %s41
      %s44 = sadd.s32 1, %s35
      %s45 = scalar_select %p42, %s44, %s35
      %p46 = scmp.ge.s32.totalorder %s45, 2
      %s47 = scalar_select %p46, 0, %s45
      %s48 = ssub.s32 %s35, %s47
      %s49 = ssub.s32 %s36, %s43
      %s50 = sor.u32 %s48, %s49
      %p51 = scmp.eq.s32.totalorder %s50, 0
      %s53 = sadd.s32 %s52, 1
      %s54 = scalar_select %p51, %s52, %s53
      %p57 = pneg %p51
      %p58 = scmp.eq.s32.totalorder %s28, 3
      %p59 = por %p57, %p58
      %p60 = scmp.ne.s32.totalorder %s52, %s55
      %p61 = scmp.eq.s32.totalorder %s28, 0
      %p62 = por %p60, %p61
      %p63 = scmp.ne.s32.totalorder %s52, %s55
      %p64 = scmp.eq.s32.totalorder %s33, 3
      %p65 = por %p63, %p64
      %p66 = scmp.ne.s32.totalorder %s55, %s56
      %p67 = scmp.eq.s32.totalorder %s33, 0
      %p68 = por %p66, %p67
      %p69 = scmp.ne.s32.totalorder %s55, %s56
      %p70 = scmp.eq.s32.totalorder %s34, 3
      %p71 = por %p69, %p70
      %p73 = scmp.ne.s32.totalorder %s56, %s72
      %p74 = scmp.eq.s32.totalorder %s34, 0
      %p75 = por %p73, %p74
      %s76 = ssub.s32 %s35, %s47
      %p77 = scmp.eq.s32.totalorder %s76, 0
      %s79 = sadd.s32 %s78, 1
      %s80 = scalar_select %p77, %s78, %s79
      %p83 = pneg %p77
      %p84 = scmp.eq.s32.totalorder %s28, 3
      %p85 = por %p83, %p84
      %p86 = scmp.ne.s32.totalorder %s78, %s81
      %p87 = scmp.eq.s32.totalorder %s28, 0
      %p88 = por %p86, %p87
      %p89 = scmp.ne.s32.totalorder %s78, %s81
      %p90 = scmp.eq.s32.totalorder %s33, 3
      %p91 = por %p89, %p90
      %p92 = scmp.ne.s32.totalorder %s81, %s82
      %p93 = scmp.eq.s32.totalorder %s33, 0
      %p94 = por %p92, %p93
      %p95 = scmp.ne.s32.totalorder %s81, %s82
      %p96 = scmp.eq.s32.totalorder %s34, 3
      %p97 = por %p95, %p96
      %p99 = scmp.ne.s32.totalorder %s82, %s98
      %p100 = scmp.eq.s32.totalorder %s34, 0
      %p101 = por %p99, %p100
      %s102 = ssub.s32 %s35, %s47
      %p103 = scmp.eq.s32.totalorder %s102, 0
      %s105 = sadd.s32 %s104, 1
      %s106 = scalar_select %p103, %s104, %s105
      %p109 = pneg %p103
      %p110 = scmp.eq.s32.totalorder %s28, 3
      %p111 = por %p109, %p110
      %p112 = scmp.ne.s32.totalorder %s104, %s107
      %p113 = scmp.eq.s32.totalorder %s28, 0
      %p114 = por %p112, %p113
      %p115 = scmp.ne.s32.totalorder %s104, %s107
      %p116 = scmp.eq.s32.totalorder %s33, 3
      %p117 = por %p115, %p116
      %p118 = scmp.ne.s32.totalorder %s107, %s108
      %p119 = scmp.eq.s32.totalorder %s33, 0
      %p120 = por %p118, %p119
      %p121 = scmp.ne.s32.totalorder %s107, %s108
      %p122 = scmp.eq.s32.totalorder %s34, 3
      %p123 = por %p121, %p122
      %p125 = scmp.ne.s32.totalorder %s108, %s124
      %p126 = scmp.eq.s32.totalorder %s34, 0
      %p127 = por %p125, %p126
      %s129 = sadd.s32 %s128, 1
      %p132 = scmp.eq.s32.totalorder %s28, 3
      %p133 = scmp.ne.s32.totalorder %s128, %s130
      %p134 = scmp.eq.s32.totalorder %s28, 0
      %p135 = por %p133, %p134
      %p136 = scmp.ne.s32.totalorder %s128, %s130
      %p137 = scmp.eq.s32.totalorder %s33, 3
      %p138 = por %p136, %p137
      %p139 = scmp.ne.s32.totalorder %s130, %s131
      %p140 = scmp.eq.s32.totalorder %s33, 0
      %p141 = por %p139, %p140
      %p142 = scmp.ne.s32.totalorder %s130, %s131
      %p143 = scmp.eq.s32.totalorder %s34, 3
      %p144 = por %p142, %p143
      %p146 = scmp.ne.s32.totalorder %s131, %s145
      %p147 = scmp.eq.s32.totalorder %s34, 0
      %p148 = por %p146, %p147
      %s150 = sadd.s32 %s149, 1
      %p153 = scmp.eq.s32.totalorder %s28, 3
      %p154 = scmp.ne.s32.totalorder %s149, %s151
      %p155 = scmp.eq.s32.totalorder %s28, 0
      %p156 = por %p154, %p155
      %p157 = scmp.ne.s32.totalorder %s149, %s151
      %p158 = scmp.eq.s32.totalorder %s33, 3
      %p159 = por %p157, %p158
      %p160 = scmp.ne.s32.totalorder %s151, %s152
      %p161 = scmp.eq.s32.totalorder %s33, 0
      %p162 = por %p160, %p161
      %p163 = scmp.ne.s32.totalorder %s151, %s152
      %p164 = scmp.eq.s32.totalorder %s34, 3
      %p165 = por %p163, %p164
      %p167 = scmp.ne.s32.totalorder %s152, %s166
      %p168 = scmp.eq.s32.totalorder %s34, 0
      %p169 = por %p167, %p168
      %s171 = sadd.s32 %s170, 1
      %p174 = scmp.eq.s32.totalorder %s28, 3
      %p175 = scmp.ne.s32.totalorder %s170, %s172
      %p176 = scmp.eq.s32.totalorder %s28, 0
      %p177 = por %p175, %p176
      %p178 = scmp.ne.s32.totalorder %s170, %s172
      %p179 = scmp.eq.s32.totalorder %s33, 3
      %p180 = por %p178, %p179
      %p181 = scmp.ne.s32.totalorder %s172, %s173
      %p182 = scmp.eq.s32.totalorder %s33, 0
      %p183 = por %p181, %p182
      %p184 = scmp.ne.s32.totalorder %s172, %s173
      %p185 = scmp.eq.s32.totalorder %s34, 3
      %p186 = por %p184, %p185
      %p188 = scmp.ne.s32.totalorder %s173, %s187
      %p189 = scmp.eq.s32.totalorder %s34, 0
      %p190 = por %p188, %p189
      %s192 = sadd.s32 %s191, 1
      %p195 = scmp.eq.s32.totalorder %s28, 3
      %p196 = scmp.ne.s32.totalorder %s191, %s193
      %p197 = scmp.eq.s32.totalorder %s28, 0
      %p198 = por %p196, %p197
      %p199 = scmp.ne.s32.totalorder %s191, %s193
      %p200 = scmp.eq.s32.totalorder %s33, 3
      %p201 = por %p199, %p200
      %p202 = scmp.ne.s32.totalorder %s193, %s194
      %p203 = scmp.eq.s32.totalorder %s33, 0
      %p204 = por %p202, %p203
      %p205 = scmp.ne.s32.totalorder %s193, %s194
      %p206 = scmp.eq.s32.totalorder %s34, 3
      %p207 = por %p205, %p206
      %p209 = scmp.ne.s32.totalorder %s194, %s208
      %p210 = scmp.eq.s32.totalorder %s34, 0
      %p211 = por %p209, %p210
      %s213 = sadd.s32 %s212, 1
      %p216 = scmp.eq.s32.totalorder %s28, 3
      %p217 = scmp.ne.s32.totalorder %s212, %s214
      %p218 = scmp.eq.s32.totalorder %s28, 0
      %p219 = por %p217, %p218
      %p220 = scmp.ne.s32.totalorder %s212, %s214
      %p221 = scmp.eq.s32.totalorder %s33, 3
      %p222 = por %p220, %p221
      %p223 = scmp.ne.s32.totalorder %s214, %s215
      %p224 = scmp.eq.s32.totalorder %s33, 0
      %p225 = por %p223, %p224
      %p226 = scmp.ne.s32.totalorder %s214, %s215
      %p227 = scmp.eq.s32.totalorder %s34, 3
      %p228 = por %p226, %p227
      %p230 = scmp.ne.s32.totalorder %s215, %s229
      %p231 = scmp.eq.s32.totalorder %s34, 0
      %p232 = por %p230, %p231
      %s234 = sadd.s32 %s233, 1
      %p237 = scmp.eq.s32.totalorder %s28, 3
      %p238 = scmp.ne.s32.totalorder %s233, %s235
      %p239 = scmp.eq.s32.totalorder %s28, 0
      %p240 = por %p238, %p239
      %p241 = scmp.ne.s32.totalorder %s233, %s235
      %p242 = scmp.eq.s32.totalorder %s33, 3
      %p243 = por %p241, %p242
      %p244 = scmp.ne.s32.totalorder %s235, %s236
      %p245 = scmp.eq.s32.totalorder %s33, 0
      %p246 = por %p244, %p245
      %p247 = scmp.ne.s32.totalorder %s235, %s236
      %p248 = scmp.eq.s32.totalorder %s34, 3
      %p249 = por %p247, %p248
      %p251 = scmp.ne.s32.totalorder %s236, %s250
      %p252 = scmp.eq.s32.totalorder %s34, 0
      %p253 = por %p251, %p252
      %s255 = sadd.s32 %s254, 1
      %p258 = scmp.eq.s32.totalorder %s28, 3
      %p259 = scmp.ne.s32.totalorder %s254, %s256
      %p260 = scmp.eq.s32.totalorder %s28, 0
      %p261 = por %p259, %p260
      %p262 = scmp.ne.s32.totalorder %s254, %s256
      %p263 = scmp.eq.s32.totalorder %s33, 3
      %p264 = por %p262, %p263
      %p265 = scmp.ne.s32.totalorder %s256, %s257
      %p266 = scmp.eq.s32.totalorder %s33, 0
      %p267 = por %p265, %p266
      %p268 = scmp.ne.s32.totalorder %s256, %s257
      %p269 = scmp.eq.s32.totalorder %s34, 3
      %p270 = por %p268, %p269
      %p272 = scmp.ne.s32.totalorder %s257, %s271
      %p273 = scmp.eq.s32.totalorder %s34, 0
      %p274 = por %p272, %p273
      %s276 = sadd.s32 %s275, 1
      %p279 = scmp.eq.s32.totalorder %s28, 3
      %p280 = scmp.ne.s32.totalorder %s275, %s277
      %p281 = scmp.eq.s32.totalorder %s28, 0
      %p282 = por %p280, %p281
      %p283 = scmp.ne.s32.totalorder %s275, %s277
      %p284 = scmp.eq.s32.totalorder %s33, 3
      %p285 = por %p283, %p284
      %p286 = scmp.ne.s32.totalorder %s277, %s278
      %p287 = scmp.eq.s32.totalorder %s33, 0
      %p288 = por %p286, %p287
      %p289 = scmp.ne.s32.totalorder %s277, %s278
      %p290 = scmp.eq.s32.totalorder %s34, 3
      %p291 = por %p289, %p290
      %p293 = scmp.ne.s32.totalorder %s278, %s292
      %p294 = scmp.eq.s32.totalorder %s34, 0
      %p295 = por %p293, %p294
      %s296 = ssub.s32 %s35, %s47
      %s297 = ssub.s32 %s36, %s43
      %s298 = sor.u32 %s296, %s297
      %p299 = scmp.eq.s32.totalorder %s298, 0
      %s301 = sadd.s32 %s300, 1
      %s302 = scalar_select %p299, %s300, %s301
      %p305 = pneg %p299
      %p306 = scmp.eq.s32.totalorder %s28, 3
      %p307 = por %p305, %p306
      %p308 = scmp.ne.s32.totalorder %s300, %s303
      %p309 = scmp.eq.s32.totalorder %s28, 0
      %p310 = por %p308, %p309
      %p311 = scmp.ne.s32.totalorder %s300, %s303
      %p312 = scmp.eq.s32.totalorder %s33, 3
      %p313 = por %p311, %p312
      %p314 = scmp.ne.s32.totalorder %s303, %s304
      %p315 = scmp.eq.s32.totalorder %s33, 0
      %p316 = por %p314, %p315
      %p317 = scmp.ne.s32.totalorder %s303, %s304
      %p318 = scmp.eq.s32.totalorder %s34, 3
      %p319 = por %p317, %p318
      %p321 = scmp.ne.s32.totalorder %s304, %s320
      %p322 = scmp.eq.s32.totalorder %s34, 0
      %p323 = por %p321, %p322
      %p324 = scmp.le.s32.totalorder 1, %s28
      %p325 = scmp.lt.s32.totalorder %s28, 5
      %p326 = pnand %p324, %p325
      %p327 = pneg %p326
      // Predicated region
      $region9: #{tpu_custom_call.1} parent=5 // pred_check
        _
      $region10: #{tpu_custom_call.1} parent=5 // pred_check_branch
        %329 = sbr.rel (%p326) target = $region12
      $region11: #{tpu_custom_call.1} parent=5 // pred_region
        %s330 = ssub.s32 %s28, 1
        // Predicated region
        $region13: #{tpu_custom_call.1} parent=11 // pred_check
          %p331 = pneg %p141
        $region14: #{tpu_custom_call.1} parent=11 // pred_check_branch
          %333 = sbr.rel (%p331) target = $region16
        $region15: #{tpu_custom_call.1} parent=11 // pred_region
          %s335 = ssub.s32 1024, 1024
          %336 = vsyncadd [#allocation11], %s335
          %s337 = sshll.u32 [#allocation10], 4
          %s338 = int_to_ptr.vmem [resolvable:$true] %s337
          %343 = dma.hbm_to_vmem [thread:$0]  %s3, 1024, %s338, [#allocation11], 64, 64, 4
        $region16: #{tpu_custom_call.1} parent=11 // pred_fallthru
          _
        // Predicated region
        $region17: #{tpu_custom_call.1} parent=11 // pred_check
          %p344 = pneg %p162
        $region18: #{tpu_custom_call.1} parent=11 // pred_check_branch
          %346 = sbr.rel (%p344) target = $region20
        $region19: #{tpu_custom_call.1} parent=11 // pred_region
          _
        $region20: #{tpu_custom_call.1} parent=11 // pred_fallthru
          _
        // Predicated region
        $region21: #{tpu_custom_call.1} parent=11 // pred_check
          %p347 = pneg %p183
        $region22: #{tpu_custom_call.1} parent=11 // pred_check_branch
          %349 = sbr.rel (%p347) target = $region24
        $region23: #{tpu_custom_call.1} parent=11 // pred_region
          %s351 = ssub.s32 1024, 1024
          %352 = vsyncadd [#allocation11], %s351
          %s353 = sshll.u32 [#allocation12], 4
          %s354 = int_to_ptr.vmem [resolvable:$true] %s353
          %359 = dma.hbm_to_vmem [thread:$0]  %s5, 1024, %s354, [#allocation11], 64, 64, 4
        $region24: #{tpu_custom_call.1} parent=11 // pred_fallthru
          _
        // Predicated region
        $region25: #{tpu_custom_call.1} parent=11 // pred_check
          %p360 = pneg %p204
        $region26: #{tpu_custom_call.1} parent=11 // pred_check_branch
          %362 = sbr.rel (%p360) target = $region28
        $region27: #{tpu_custom_call.1} parent=11 // pred_region
          _
        $region28: #{tpu_custom_call.1} parent=11 // pred_fallthru
          _
        // Predicated region
        $region29: #{tpu_custom_call.1} parent=11 // pred_check
          %p363 = pneg %p225
        $region30: #{tpu_custom_call.1} parent=11 // pred_check_branch
          %365 = sbr.rel (%p363) target = $region32
        $region31: #{tpu_custom_call.1} parent=11 // pred_region
          %s367 = ssub.s32 1024, 1024
          %368 = vsyncadd [#allocation14], %s367
          %s369 = sshll.u32 [#allocation13], 4
          %s370 = int_to_ptr.vmem [resolvable:$true] %s369
          %375 = dma.hbm_to_vmem [thread:$0]  %s7, 1024, %s370, [#allocation14], 64, 64, 4
        $region32: #{tpu_custom_call.1} parent=11 // pred_fallthru
          _
        // Predicated region
        $region33: #{tpu_custom_call.1} parent=11 // pred_check
          %p376 = pneg %p246
        $region34: #{tpu_custom_call.1} parent=11 // pred_check_branch
          %378 = sbr.rel (%p376) target = $region36
        $region35: #{tpu_custom_call.1} parent=11 // pred_region
          _
        $region36: #{tpu_custom_call.1} parent=11 // pred_fallthru
          _
        // Predicated region
        $region37: #{tpu_custom_call.1} parent=11 // pred_check
          %p379 = pneg %p267
        $region38: #{tpu_custom_call.1} parent=11 // pred_check_branch
          %381 = sbr.rel (%p379) target = $region40
        $region39: #{tpu_custom_call.1} parent=11 // pred_region
          %s383 = ssub.s32 1024, 1024
          %384 = vsyncadd [#allocation14], %s383
          %s385 = sshll.u32 [#allocation15], 4
          %s386 = int_to_ptr.vmem [resolvable:$true] %s385
          %391 = dma.hbm_to_vmem [thread:$0]  %s9, 1024, %s386, [#allocation14], 64, 64, 4
        $region40: #{tpu_custom_call.1} parent=11 // pred_fallthru
          _
        // Predicated region
        $region41: #{tpu_custom_call.1} parent=11 // pred_check
          %p392 = pneg %p288
        $region42: #{tpu_custom_call.1} parent=11 // pred_check_branch
          %394 = sbr.rel (%p392) target = $region44
        $region43: #{tpu_custom_call.1} parent=11 // pred_region
          _
        $region44: #{tpu_custom_call.1} parent=11 // pred_fallthru
          _
      $region12: #{tpu_custom_call.1} parent=5 // pred_fallthru
        _
      %p395 = scmp.lt.s32.totalorder %s28, 4
      // Predicated region
      $region45: #{tpu_custom_call.1} parent=5 // pred_check
        %p396 = pneg %p395
      $region46: #{tpu_custom_call.1} parent=5 // pred_check_branch
        %398 = sbr.rel (%p396) target = $region48
      $region47: #{tpu_custom_call.1} parent=5 // pred_region
        // Predicated region
        $region49: #{tpu_custom_call.1} parent=47 // pred_check
          %p399 = pneg %p62
        $region50: #{tpu_custom_call.1} parent=47 // pred_check_branch
          %401 = sbr.rel (%p399) target = $region52
        $region51: #{tpu_custom_call.1} parent=47 // pred_region
          %s402 = sand.u32 %s52, 1
          %s403 = scalar_lea.sflag [#allocation5], %s402
          %s404 = sand.u32 %s52, 1
          %s405 = smul.addr %s404, 8
          %s406 = scalar_lea.vmem [#allocation4], %s405
          %s408 = ssub.s32 128, 128
          %409 = vsyncadd %s403, %s408
          %s410 = smul.addr %s35, 2
          %s411 = sadd.s32 %s36, %s410
          %s412 = smul.addr %s411, 128
          %s413 = scalar_lea.hbm %s0, %s412
          %s415 = sshll.u32 %s406, 4
          %s416 = int_to_ptr.vmem [resolvable:$true] %s415
          %418 = dma.hbm_to_vmem [thread:$0]  %s413, 128, %s416, %s403
        $region52: #{tpu_custom_call.1} parent=47 // pred_fallthru
          _
        // Predicated region
        $region53: #{tpu_custom_call.1} parent=47 // pred_check
          %p419 = pneg %p88
        $region54: #{tpu_custom_call.1} parent=47 // pred_check_branch
          %421 = sbr.rel (%p419) target = $region56
        $region55: #{tpu_custom_call.1} parent=47 // pred_region
          %s422 = sand.u32 %s28, 1
          %s423 = scalar_lea.sflag [#allocation8], %s422
          %s424 = sand.u32 %s78, 1
          %s425 = smul.addr %s424, 16
          %s426 = scalar_lea.vmem [#allocation7], %s425
          %s428 = ssub.s32 256, 256
          %429 = vsyncadd %s423, %s428
          %s430 = smul.addr %s35, 2
          %s431 = smul.addr %s430, 128
          %s432 = scalar_lea.hbm %s1, %s431
          %s433 = sshll.u32 %s426, 4
          %s434 = int_to_ptr.vmem [resolvable:$true] %s433
          %439 = dma.hbm_to_vmem [thread:$0]  %s432, 256, %s434, %s423, 128, 128, 8
        $region56: #{tpu_custom_call.1} parent=47 // pred_fallthru
          _
        // Predicated region
        $region57: #{tpu_custom_call.1} parent=47 // pred_check
          %p440 = pneg %p114
        $region58: #{tpu_custom_call.1} parent=47 // pred_check_branch
          %442 = sbr.rel (%p440) target = $region60
        $region59: #{tpu_custom_call.1} parent=47 // pred_region
          %s443 = sand.u32 %s28, 1
          %s444 = scalar_lea.sflag [#allocation8], %s443
          %s445 = sand.u32 %s104, 1
          %s446 = smul.addr %s445, 16
          %s447 = scalar_lea.vmem [#allocation9], %s446
          %s449 = ssub.s32 256, 256
          %450 = vsyncadd %s444, %s449
          %s451 = smul.addr %s35, 2
          %s452 = smul.addr %s451, 128
          %s453 = scalar_lea.hbm %s2, %s452
          %s454 = sshll.u32 %s447, 4
          %s455 = int_to_ptr.vmem [resolvable:$true] %s454
          %460 = dma.hbm_to_vmem [thread:$0]  %s453, 256, %s455, %s444, 128, 128, 8
        $region60: #{tpu_custom_call.1} parent=47 // pred_fallthru
          _
      $region48: #{tpu_custom_call.1} parent=5 // pred_fallthru
        _
      %p461 = scmp.le.s32.totalorder 1, %s28
      %p462 = scmp.lt.s32.totalorder %s28, 5
      %p463 = pnand %p461, %p462
      %p464 = pneg %p463
      // Predicated region
      $region61: #{tpu_custom_call.1} parent=5 // pred_check
        _
      $region62: #{tpu_custom_call.1} parent=5 // pred_check_branch
        %466 = sbr.rel (%p463) target = $region64
      $region63: #{tpu_custom_call.1} parent=5 // pred_region
        %s467 = ssub.s32 %s28, 1
        %s468 = sand.u32 %s55, 1
        %s469 = scalar_lea.sflag [#allocation5], %s468
        %s470 = sand.u32 %s55, 1
        %s471 = smul.addr %s470, 8
        %s472 = scalar_lea.vmem [#allocation4], %s471
        // Predicated region
        $region65: #{tpu_custom_call.1} parent=63 // pred_check
          %p473 = pneg %p68
        $region66: #{tpu_custom_call.1} parent=63 // pred_check_branch
          %475 = sbr.rel (%p473) target = $region68
        $region67: #{tpu_custom_call.1} parent=63 // pred_region
          %476 = dma.done %s469, 128
        $region68: #{tpu_custom_call.1} parent=63 // pred_fallthru
          _
        %s477 = sand.u32 %s33, 1
        %s478 = scalar_lea.sflag [#allocation8], %s477
        %s479 = sand.u32 %s81, 1
        %s480 = smul.addr %s479, 16
        %s481 = scalar_lea.vmem [#allocation7], %s480
        // Predicated region
        $region69: #{tpu_custom_call.1} parent=63 // pred_check
          %p482 = pneg %p94
        $region70: #{tpu_custom_call.1} parent=63 // pred_check_branch
          %484 = sbr.rel (%p482) target = $region72
        $region71: #{tpu_custom_call.1} parent=63 // pred_region
          %485 = dma.done %s478, 256
        $region72: #{tpu_custom_call.1} parent=63 // pred_fallthru
          _
        %s486 = sand.u32 %s33, 1
        %s487 = scalar_lea.sflag [#allocation8], %s486
        %s488 = sand.u32 %s107, 1
        %s489 = smul.addr %s488, 16
        %s490 = scalar_lea.vmem [#allocation9], %s489
        // Predicated region
        $region73: #{tpu_custom_call.1} parent=63 // pred_check
          %p491 = pneg %p120
        $region74: #{tpu_custom_call.1} parent=63 // pred_check_branch
          %493 = sbr.rel (%p491) target = $region76
        $region75: #{tpu_custom_call.1} parent=63 // pred_region
          %494 = dma.done %s487, 256
        $region76: #{tpu_custom_call.1} parent=63 // pred_fallthru
          _
        // Predicated region
        $region77: #{tpu_custom_call.1} parent=63 // pred_check
          %p495 = pneg %p141
        $region78: #{tpu_custom_call.1} parent=63 // pred_check_branch
          %497 = sbr.rel (%p495) target = $region80
        $region79: #{tpu_custom_call.1} parent=63 // pred_region
          %498 = dma.done [#allocation11], 1024
        $region80: #{tpu_custom_call.1} parent=63 // pred_fallthru
          _
        // Predicated region
        $region81: #{tpu_custom_call.1} parent=63 // pred_check
          %p499 = pneg %p183
        $region82: #{tpu_custom_call.1} parent=63 // pred_check_branch
          %501 = sbr.rel (%p499) target = $region84
        $region83: #{tpu_custom_call.1} parent=63 // pred_region
          %502 = dma.done [#allocation11], 1024
        $region84: #{tpu_custom_call.1} parent=63 // pred_fallthru
          _
        // Predicated region
        $region85: #{tpu_custom_call.1} parent=63 // pred_check
          %p503 = pneg %p225
        $region86: #{tpu_custom_call.1} parent=63 // pred_check_branch
          %505 = sbr.rel (%p503) target = $region88
        $region87: #{tpu_custom_call.1} parent=63 // pred_region
          %506 = dma.done [#allocation14], 1024
        $region88: #{tpu_custom_call.1} parent=63 // pred_fallthru
          _
        // Predicated region
        $region89: #{tpu_custom_call.1} parent=63 // pred_check
          %p507 = pneg %p267
        $region90: #{tpu_custom_call.1} parent=63 // pred_check_branch
          %509 = sbr.rel (%p507) target = $region92
        $region91: #{tpu_custom_call.1} parent=63 // pred_region
          %510 = dma.done [#allocation14], 1024
        $region92: #{tpu_custom_call.1} parent=63 // pred_fallthru
          _
        %s511 = sand.u32 %s55, 1
        %s512 = scalar_lea.sflag [#allocation5], %s511
        %s513 = sand.u32 %s55, 1
        %s514 = smul.addr %s513, 8
        %s515 = scalar_lea.vmem [#allocation4], %s514
        %p516 = pneg %p68
        %p517 = pneg %p65
        %s518 = sand.u32 %s33, 1
        %s519 = scalar_lea.sflag [#allocation8], %s518
        %s520 = sand.u32 %s81, 1
        %s521 = smul.addr %s520, 16
        %s522 = scalar_lea.vmem [#allocation7], %s521
        %p523 = pneg %p94
        %p524 = pneg %p91
        %s525 = sand.u32 %s33, 1
        %s526 = scalar_lea.sflag [#allocation8], %s525
        %s527 = sand.u32 %s107, 1
        %s528 = smul.addr %s527, 16
        %s529 = scalar_lea.vmem [#allocation9], %s528
        %p530 = pneg %p120
        %p531 = pneg %p117
        %p532 = pneg %p141
        %p533 = pneg %p138
        %p534 = pneg %p162
        %p535 = pneg %p159
        %p536 = pneg %p183
        %p537 = pneg %p180
        %p538 = pneg %p204
        %p539 = pneg %p201
        %p540 = pneg %p225
        %p541 = pneg %p222
        %p542 = pneg %p246
        %p543 = pneg %p243
        %p544 = pneg %p267
        %p545 = pneg %p264
        %p546 = pneg %p288
        %p547 = pneg %p285
        %p548 = pneg %p316
        %p549 = pneg %p313
        %s550 = sand.u32 %s303, 1
        %s551 = scalar_lea.sflag [#allocation6], %s550
        %s552 = sand.u32 %s303, 1
        %s553 = smul.addr %s552, 8
        %s554 = scalar_lea.vmem [#allocation16], %s553
        %p556 = scmp.eq.s32.totalorder %s38, 0
        // Predicated region
        $region93: #{tpu_custom_call.1} parent=63 // pred_check
          %p557 = pneg %p556
        $region94: #{tpu_custom_call.1} parent=63 // pred_check_branch
          %559 = sbr.rel (%p557) target = $region96
        $region95: #{tpu_custom_call.1} parent=63 // pred_region
          %v560 = vld [vmem:[%s481] sm:$0xff]
          %v561 = vld [vmem:[%s481 + $0x8] sm:$0xff]
          %v562 = vpack.c.bf16 %v561, %v560
          %v563 = vld [vmem:[%s490] sm:$0xff]
          %v564 = vld [vmem:[%s490 + $0x8] sm:$0xff]
          %v565 = vpack.c.bf16 %v564, %v563
          %v566 = vld [vmem:[#allocation12] sm:$0xf]
          %v567 = vld [vmem:[#allocation12 + $0x4] sm:$0xf]
          %v568 = vld [vmem:[#allocation12 + $0x8] sm:$0xf]
          %v569 = vld [vmem:[#allocation12 + $0xc] sm:$0xf]
          %v570 = vld [vmem:[#allocation12 + $0x10] sm:$0xf]
          %v571 = vld [vmem:[#allocation12 + $0x14] sm:$0xf]
          %v572 = vld [vmem:[#allocation12 + $0x18] sm:$0xf]
          %v573 = vld [vmem:[#allocation12 + $0x1c] sm:$0xf]
          %v574 = vld [vmem:[#allocation12 + $0x20] sm:$0xf]
          %v575 = vld [vmem:[#allocation12 + $0x24] sm:$0xf]
          %v576 = vld [vmem:[#allocation12 + $0x28] sm:$0xf]
          %v577 = vld [vmem:[#allocation12 + $0x2c] sm:$0xf]
          %v578 = vld [vmem:[#allocation12 + $0x30] sm:$0xf]
          %v579 = vld [vmem:[#allocation12 + $0x34] sm:$0xf]
          %v580 = vld [vmem:[#allocation12 + $0x38] sm:$0xf]
          %v581 = vld [vmem:[#allocation12 + $0x3c] sm:$0xf]
          %v582 = vld [vmem:[%s6] sm:$0x1]
          %v584 = vlaneseq
          %v585 = vshrl.u32 %v584, 7
          %v586 = vsub.s32 0, %v585
          %v587 = vrot.slane %v582, %v586
          %v605 = vunpack.c.l.b16 %v566
          %v606 = vunpack.c.l.b16 %v567
          %v607 = vunpack.c.l.b16 %v568
          %v608 = vunpack.c.l.b16 %v569
          %v609 = vunpack.c.l.b16 %v570
          %v610 = vunpack.c.l.b16 %v571
          %v611 = vunpack.c.l.b16 %v572
          %v612 = vunpack.c.l.b16 %v573
          %v613 = vunpack.c.l.b16 %v574
          %v614 = vunpack.c.l.b16 %v575
          %v615 = vunpack.c.l.b16 %v576
          %v616 = vunpack.c.l.b16 %v577
          %v617 = vunpack.c.l.b16 %v578
          %v618 = vunpack.c.l.b16 %v579
          %v619 = vunpack.c.l.b16 %v580
          %v620 = vunpack.c.l.b16 %v581
          %v621 = vpack.c.b16 %v606, %v605
          %v622 = vpack.c.b16 %v608, %v607
          %v623 = vpack.c.b16 %v610, %v609
          %v624 = vpack.c.b16 %v612, %v611
          %v625 = vpack.c.b16 %v614, %v613
          %v626 = vpack.c.b16 %v616, %v615
          %v627 = vpack.c.b16 %v618, %v617
          %v628 = vpack.c.b16 %v620, %v619
          %637 = vmatprep.subr.bf16.mxu0 0
          %638 = vmatpush1.bf16.msra.mxu0 %v621
          %639 = vmatprep.subr.bf16.mxu0 0
          %640 = vmatpush1.bf16.msra.mxu0 %v622
          %641 = vmatprep.subr.bf16.mxu0 0
          %642 = vmatpush1.bf16.msra.mxu0 %v623
          %643 = vmatprep.subr.bf16.mxu0 0
          %644 = vmatpush1.bf16.msra.mxu0 %v624
          %645 = vmatprep.subr.bf16.mxu0 0
          %646 = vmatpush1.bf16.msra.mxu0 %v625
          %647 = vmatprep.subr.bf16.mxu0 0
          %648 = vmatpush1.bf16.msra.mxu0 %v626
          %649 = vmatprep.subr.bf16.mxu0 0
          %650 = vmatpush1.bf16.msra.mxu0 %v627
          %651 = vmatprep.subr.bf16.mxu0 0
          %652 = vmatpush1.bf16.msra.mxu0 %v628
          %653 = vmatprep.subr.bf16.mxu0 0
          %654 = vmatpush1.bf16.msra.mxu0 0
          %655 = vmatprep.subr.bf16.mxu0 0
          %656 = vmatpush1.bf16.msra.mxu0 0
          %657 = vmatprep.subr.bf16.mxu0 0
          %658 = vmatpush1.bf16.msra.mxu0 0
          %659 = vmatprep.subr.bf16.mxu0 0
          %660 = vmatpush1.bf16.msra.mxu0 0
          %661 = vmatprep.subr.bf16.mxu0 0
          %662 = vmatpush1.bf16.msra.mxu0 0
          %663 = vmatprep.subr.bf16.mxu0 0
          %664 = vmatpush1.bf16.msra.mxu0 0
          %665 = vmatprep.subr.bf16.mxu0 0
          %666 = vmatpush1.bf16.msra.mxu0 0
          %667 = vmatprep.subr.bf16.mxu0 0
          %668 = vmatpush1.bf16.msra.mxu0 0
          %669 = vmatprep.mubr.bf16.mxu0 0
          %670 = vmatmul.mubr.bf16.gmra.mrb[0].mxu0 %v562
          %v671 = vpop.f32.mrb[0].mxu0
          %v672 = vadd.f32 %v587, %v671
          %v673 = vpop.f32.mrb[0].mxu0
          %v674 = vpop.f32.mrb[0].mxu0
          %v675 = vadd.f32 %v587, %v674
          %v676 = vpop.f32.mrb[0].mxu0
          %677 = vdwg.mxu0
          %v678 = vld [vmem:[#allocation13] sm:$0xf]
          %v679 = vld [vmem:[#allocation13 + $0x4] sm:$0xf]
          %v680 = vld [vmem:[#allocation13 + $0x8] sm:$0xf]
          %v681 = vld [vmem:[#allocation13 + $0xc] sm:$0xf]
          %v682 = vld [vmem:[#allocation13 + $0x10] sm:$0xf]
          %v683 = vld [vmem:[#allocation13 + $0x14] sm:$0xf]
          %v684 = vld [vmem:[#allocation13 + $0x18] sm:$0xf]
          %v685 = vld [vmem:[#allocation13 + $0x1c] sm:$0xf]
          %v686 = vld [vmem:[#allocation13 + $0x20] sm:$0xf]
          %v687 = vld [vmem:[#allocation13 + $0x24] sm:$0xf]
          %v688 = vld [vmem:[#allocation13 + $0x28] sm:$0xf]
          %v689 = vld [vmem:[#allocation13 + $0x2c] sm:$0xf]
          %v690 = vld [vmem:[#allocation13 + $0x30] sm:$0xf]
          %v691 = vld [vmem:[#allocation13 + $0x34] sm:$0xf]
          %v692 = vld [vmem:[#allocation13 + $0x38] sm:$0xf]
          %v693 = vld [vmem:[#allocation13 + $0x3c] sm:$0xf]
          %v694 = vld [vmem:[%s8] sm:$0x1]
          %v696 = vlaneseq
          %v697 = vshrl.u32 %v696, 7
          %v698 = vsub.s32 0, %v697
          %v699 = vrot.slane %v694, %v698
          %v717 = vunpack.c.l.b16 %v678
          %v718 = vunpack.c.l.b16 %v679
          %v719 = vunpack.c.l.b16 %v680
          %v720 = vunpack.c.l.b16 %v681
          %v721 = vunpack.c.l.b16 %v682
          %v722 = vunpack.c.l.b16 %v683
          %v723 = vunpack.c.l.b16 %v684
          %v724 = vunpack.c.l.b16 %v685
          %v725 = vunpack.c.l.b16 %v686
          %v726 = vunpack.c.l.b16 %v687
          %v727 = vunpack.c.l.b16 %v688
          %v728 = vunpack.c.l.b16 %v689
          %v729 = vunpack.c.l.b16 %v690
          %v730 = vunpack.c.l.b16 %v691
          %v731 = vunpack.c.l.b16 %v692
          %v732 = vunpack.c.l.b16 %v693
          %v733 = vpack.c.b16 %v718, %v717
          %v734 = vpack.c.b16 %v720, %v719
          %v735 = vpack.c.b16 %v722, %v721
          %v736 = vpack.c.b16 %v724, %v723
          %v737 = vpack.c.b16 %v726, %v725
          %v738 = vpack.c.b16 %v728, %v727
          %v739 = vpack.c.b16 %v730, %v729
          %v740 = vpack.c.b16 %v732, %v731
          %749 = vmatprep.subr.bf16.mxu0 0
          %750 = vmatpush1.bf16.msra.mxu0 %v733
          %751 = vmatprep.subr.bf16.mxu0 0
          %752 = vmatpush1.bf16.msra.mxu0 %v734
          %753 = vmatprep.subr.bf16.mxu0 0
          %754 = vmatpush1.bf16.msra.mxu0 %v735
          %755 = vmatprep.subr.bf16.mxu0 0
          %756 = vmatpush1.bf16.msra.mxu0 %v736
          %757 = vmatprep.subr.bf16.mxu0 0
          %758 = vmatpush1.bf16.msra.mxu0 %v737
          %759 = vmatprep.subr.bf16.mxu0 0
          %760 = vmatpush1.bf16.msra.mxu0 %v738
          %761 = vmatprep.subr.bf16.mxu0 0
          %762 = vmatpush1.bf16.msra.mxu0 %v739
          %763 = vmatprep.subr.bf16.mxu0 0
          %764 = vmatpush1.bf16.msra.mxu0 %v740
          %765 = vmatprep.subr.bf16.mxu0 0
          %766 = vmatpush1.bf16.msra.mxu0 0
          %767 = vmatprep.subr.bf16.mxu0 0
          %768 = vmatpush1.bf16.msra.mxu0 0
          %769 = vmatprep.subr.bf16.mxu0 0
          %770 = vmatpush1.bf16.msra.mxu0 0
          %771 = vmatprep.subr.bf16.mxu0 0
          %772 = vmatpush1.bf16.msra.mxu0 0
          %773 = vmatprep.subr.bf16.mxu0 0
          %774 = vmatpush1.bf16.msra.mxu0 0
          %775 = vmatprep.subr.bf16.mxu0 0
          %776 = vmatpush1.bf16.msra.mxu0 0
          %777 = vmatprep.subr.bf16.mxu0 0
          %778 = vmatpush1.bf16.msra.mxu0 0
          %779 = vmatprep.subr.bf16.mxu0 0
          %780 = vmatpush1.bf16.msra.mxu0 0
          %781 = vmatprep.mubr.bf16.mxu0 0
          %782 = vmatmul.mubr.bf16.gmra.mrb[0].mxu0 %v565
          %v783 = vpop.f32.mrb[0].mxu0
          %v784 = vadd.f32 %v699, %v783
          %v785 = vpop.f32.mrb[0].mxu0
          %v786 = vpop.f32.mrb[0].mxu0
          %v787 = vadd.f32 %v699, %v786
          %v788 = vpop.f32.mrb[0].mxu0
          %789 = vdwg.mxu0
          %v790 = vpack.c.bf16 %v675, %v672
          %791 = vst [vmem:[#allocation2] sm:$0xff] %v790
          %v792 = vpack.c.bf16 %v787, %v784
          %793 = vst [vmem:[#allocation3] sm:$0xff] %v792
        $region96: #{tpu_custom_call.1} parent=63 // pred_fallthru
          _
        %v794 = vld [vmem:[%s472] sm:$0xff]
        %v795 = vpack.c.bf16 %v794, %v794
        %v796 = vld [vmem:[#allocation10] sm:$0xf]
        %v797 = vld [vmem:[#allocation10 + $0x4] sm:$0xf]
        %v798 = vld [vmem:[#allocation10 + $0x8] sm:$0xf]
        %v799 = vld [vmem:[#allocation10 + $0xc] sm:$0xf]
        %v800 = vld [vmem:[#allocation10 + $0x10] sm:$0xf]
        %v801 = vld [vmem:[#allocation10 + $0x14] sm:$0xf]
        %v802 = vld [vmem:[#allocation10 + $0x18] sm:$0xf]
        %v803 = vld [vmem:[#allocation10 + $0x1c] sm:$0xf]
        %v804 = vld [vmem:[#allocation10 + $0x20] sm:$0xf]
        %v805 = vld [vmem:[#allocation10 + $0x24] sm:$0xf]
        %v806 = vld [vmem:[#allocation10 + $0x28] sm:$0xf]
        %v807 = vld [vmem:[#allocation10 + $0x2c] sm:$0xf]
        %v808 = vld [vmem:[#allocation10 + $0x30] sm:$0xf]
        %v809 = vld [vmem:[#allocation10 + $0x34] sm:$0xf]
        %v810 = vld [vmem:[#allocation10 + $0x38] sm:$0xf]
        %v811 = vld [vmem:[#allocation10 + $0x3c] sm:$0xf]
        %v812 = vld [vmem:[%s4] sm:$0x1]
        %v814 = vlaneseq
        %v815 = vshrl.u32 %v814, 7
        %v816 = vsub.s32 0, %v815
        %v817 = vrot.slane %v812, %v816
        %v835 = vunpack.c.l.b16 %v796
        %v836 = vunpack.c.l.b16 %v797
        %v837 = vunpack.c.l.b16 %v798
        %v838 = vunpack.c.l.b16 %v799
        %v839 = vunpack.c.l.b16 %v800
        %v840 = vunpack.c.l.b16 %v801
        %v841 = vunpack.c.l.b16 %v802
        %v842 = vunpack.c.l.b16 %v803
        %v843 = vunpack.c.l.b16 %v804
        %v844 = vunpack.c.l.b16 %v805
        %v845 = vunpack.c.l.b16 %v806
        %v846 = vunpack.c.l.b16 %v807
        %v847 = vunpack.c.l.b16 %v808
        %v848 = vunpack.c.l.b16 %v809
        %v849 = vunpack.c.l.b16 %v810
        %v850 = vunpack.c.l.b16 %v811
        %v851 = vpack.c.b16 %v836, %v835
        %v852 = vpack.c.b16 %v838, %v837
        %v853 = vpack.c.b16 %v840, %v839
        %v854 = vpack.c.b16 %v842, %v841
        %v855 = vpack.c.b16 %v844, %v843
        %v856 = vpack.c.b16 %v846, %v845
        %v857 = vpack.c.b16 %v848, %v847
        %v858 = vpack.c.b16 %v850, %v849
        %867 = vmatprep.subr.bf16.mxu0 0
        %868 = vmatpush1.bf16.msra.mxu0 %v851
        %869 = vmatprep.subr.bf16.mxu0 0
        %870 = vmatpush1.bf16.msra.mxu0 %v852
        %871 = vmatprep.subr.bf16.mxu0 0
        %872 = vmatpush1.bf16.msra.mxu0 %v853
        %873 = vmatprep.subr.bf16.mxu0 0
        %874 = vmatpush1.bf16.msra.mxu0 %v854
        %875 = vmatprep.subr.bf16.mxu0 0
        %876 = vmatpush1.bf16.msra.mxu0 %v855
        %877 = vmatprep.subr.bf16.mxu0 0
        %878 = vmatpush1.bf16.msra.mxu0 %v856
        %879 = vmatprep.subr.bf16.mxu0 0
        %880 = vmatpush1.bf16.msra.mxu0 %v857
        %881 = vmatprep.subr.bf16.mxu0 0
        %882 = vmatpush1.bf16.msra.mxu0 %v858
        %883 = vmatprep.subr.bf16.mxu0 0
        %884 = vmatpush1.bf16.msra.mxu0 0
        %885 = vmatprep.subr.bf16.mxu0 0
        %886 = vmatpush1.bf16.msra.mxu0 0
        %887 = vmatprep.subr.bf16.mxu0 0
        %888 = vmatpush1.bf16.msra.mxu0 0
        %889 = vmatprep.subr.bf16.mxu0 0
        %890 = vmatpush1.bf16.msra.mxu0 0
        %891 = vmatprep.subr.bf16.mxu0 0
        %892 = vmatpush1.bf16.msra.mxu0 0
        %893 = vmatprep.subr.bf16.mxu0 0
        %894 = vmatpush1.bf16.msra.mxu0 0
        %895 = vmatprep.subr.bf16.mxu0 0
        %896 = vmatpush1.bf16.msra.mxu0 0
        %897 = vmatprep.subr.bf16.mxu0 0
        %898 = vmatpush1.bf16.msra.mxu0 0
        %899 = vmatprep.mubr.bf16.mxu0 0
        %900 = vmatmul.mubr.bf16.gmra.mrb[0].mxu0 %v795
        %v901 = vpop.f32.mrb[0].mxu0
        %v902 = vadd.f32 %v817, %v901
        %v903 = vpop.f32.mrb[0].mxu0
        %v904 = vpop.f32.mrb[0].mxu0
        %v905 = vpop.f32.mrb[0].mxu0
        %906 = vdwg.mxu0
        %v907 = vpack.c.bf16 %v902, %v902
        %v908 = vld [vmem:[#allocation2] sm:$0xff]
        %v909 = vld [vmem:[#allocation3] sm:$0xff]
        %vm910 = vcmask 261120
        %v912 = vsel %vm910, %v907, 0
        %v915 = vsel %vm910, %v908, 0
        %917 = vmatprep.subr.bf16.mxu0 0
        %918 = vmatpush1.bf16.xpose.msra.mxu0 %v915
        %919 = vmatprep.subr.bf16.mxu0 0
        %920 = vmatpush1.bf16.xpose.msra.mxu0 0
        %921 = vmatprep.subr.bf16.mxu0 0
        %922 = vmatpush1.bf16.xpose.msra.mxu0 0
        %923 = vmatprep.subr.bf16.mxu0 0
        %924 = vmatpush1.bf16.xpose.msra.mxu0 0
        %925 = vmatprep.subr.bf16.mxu0 0
        %926 = vmatpush1.bf16.xpose.msra.mxu0 0
        %927 = vmatprep.subr.bf16.mxu0 0
        %928 = vmatpush1.bf16.xpose.msra.mxu0 0
        %929 = vmatprep.subr.bf16.mxu0 0
        %930 = vmatpush1.bf16.xpose.msra.mxu0 0
        %931 = vmatprep.subr.bf16.mxu0 0
        %932 = vmatpush1.bf16.xpose.msra.mxu0 0
        %933 = vmatprep.subr.bf16.mxu0 0
        %934 = vmatpush1.bf16.xpose.msra.mxu0 0
        %935 = vmatprep.subr.bf16.mxu0 0
        %936 = vmatpush1.bf16.xpose.msra.mxu0 0
        %937 = vmatprep.subr.bf16.mxu0 0
        %938 = vmatpush1.bf16.xpose.msra.mxu0 0
        %939 = vmatprep.subr.bf16.mxu0 0
        %940 = vmatpush1.bf16.xpose.msra.mxu0 0
        %941 = vmatprep.subr.bf16.mxu0 0
        %942 = vmatpush1.bf16.xpose.msra.mxu0 0
        %943 = vmatprep.subr.bf16.mxu0 0
        %944 = vmatpush1.bf16.xpose.msra.mxu0 0
        %945 = vmatprep.subr.bf16.mxu0 0
        %946 = vmatpush1.bf16.xpose.msra.mxu0 0
        %947 = vmatprep.subr.bf16.mxu0 0
        %948 = vmatpush1.bf16.xpose.msra.mxu0 0
        %949 = vmatprep.mubr.bf16.mxu0 0
        %950 = vmatmul.mubr.bf16.gmra.mrb[0].mxu0 %v912
        %v951 = vpop.f32.mrb[0].mxu0
        %v952 = vadd.f32 0.0, %v951
        %v953 = vpop.f32.mrb[0].mxu0
        %v954 = vpop.f32.mrb[0].mxu0
        %v955 = vpop.f32.mrb[0].mxu0
        %956 = vdwg.mxu0
        %vm957 = vcmask 130048
        %v958 = vsel %vm957, %v952, -inf
        %959 = vmax.xlane.f32.xlu0 %v958
        %v960 = vpop.xlane.xlu0 %959
        %v961 = vsub.f32 %v952, %v960
        %v962 = vmul.f32 %v961, 1.442695
        %v963 = vpow.pop %v962
        %v964 = vsel %vm957, %v963, 0.0
        %965 = vadd.xlane.f32.xlu0 %v964
        %v966 = vpop.xlane.xlu0 %965
        %v967 = vrcp.pop %v966
        %v968 = vmul.f32 %v963, %v967
        %v969 = vpack.c.bf16 %v968, %v968
        %v971 = vsel %vm957, %v969, 0
        %973 = vmatprep.subr.bf16.mxu0 0
        %974 = vmatpush1.bf16.msra.mxu0 %v909
        %975 = vmatprep.subr.bf16.mxu0 0
        %976 = vmatpush1.bf16.msra.mxu0 0
        %977 = vmatprep.subr.bf16.mxu0 0
        %978 = vmatpush1.bf16.msra.mxu0 0
        %979 = vmatprep.subr.bf16.mxu0 0
        %980 = vmatpush1.bf16.msra.mxu0 0
        %981 = vmatprep.subr.bf16.mxu0 0
        %982 = vmatpush1.bf16.msra.mxu0 0
        %983 = vmatprep.subr.bf16.mxu0 0
        %984 = vmatpush1.bf16.msra.mxu0 0
        %985 = vmatprep.subr.bf16.mxu0 0
        %986 = vmatpush1.bf16.msra.mxu0 0
        %987 = vmatprep.subr.bf16.mxu0 0
        %988 = vmatpush1.bf16.msra.mxu0 0
        %989 = vmatprep.subr.bf16.mxu0 0
        %990 = vmatpush1.bf16.msra.mxu0 0
        %991 = vmatprep.subr.bf16.mxu0 0
        %992 = vmatpush1.bf16.msra.mxu0 0
        %993 = vmatprep.subr.bf16.mxu0 0
        %994 = vmatpush1.bf16.msra.mxu0 0
        %995 = vmatprep.subr.bf16.mxu0 0
        %996 = vmatpush1.bf16.msra.mxu0 0
        %997 = vmatprep.subr.bf16.mxu0 0
        %998 = vmatpush1.bf16.msra.mxu0 0
        %999 = vmatprep.subr.bf16.mxu0 0
        %1000 = vmatpush1.bf16.msra.mxu0 0
        %1001 = vmatprep.subr.bf16.mxu0 0
        %1002 = vmatpush1.bf16.msra.mxu0 0
        %1003 = vmatprep.subr.bf16.mxu0 0
        %1004 = vmatpush1.bf16.msra.mxu0 0
        %1005 = vmatprep.mubr.bf16.mxu0 0
        %1006 = vmatmul.mubr.bf16.gmra.mrb[0].mxu0 %v971
        %v1007 = vpop.f32.mrb[0].mxu0
        %v1008 = vadd.f32 0.0, %v1007
        %v1009 = vpop.f32.mrb[0].mxu0
        %v1010 = vpop.f32.mrb[0].mxu0
        %v1011 = vpop.f32.mrb[0].mxu0
        %1012 = vdwg.mxu0
        %v1013 = vld [vmem:[#allocation15] sm:$0xf]
        %v1014 = vld [vmem:[#allocation15 + $0x4] sm:$0xf]
        %v1015 = vld [vmem:[#allocation15 + $0x8] sm:$0xf]
        %v1016 = vld [vmem:[#allocation15 + $0xc] sm:$0xf]
        %v1017 = vpack.c.bf16 %v1008, %v1008
        %1019 = vrot.lane.b32.xlu0 %v907, 96
        %v1020 = vpop.permute.xlu0 %1019
        %1022 = vrot.lane.b32.xlu0 %v908, 96
        %v1023 = vpop.permute.xlu0 %1022
        %v1025 = vsel %vm910, %v1020, 0
        %v1028 = vsel %vm910, %v1023, 0
        %1030 = vmatprep.subr.bf16.mxu0 0
        %1031 = vmatpush1.bf16.xpose.msra.mxu0 %v1028
        %1032 = vmatprep.subr.bf16.mxu0 0
        %1033 = vmatpush1.bf16.xpose.msra.mxu0 0
        %1034 = vmatprep.subr.bf16.mxu0 0
        %1035 = vmatpush1.bf16.xpose.msra.mxu0 0
        %1036 = vmatprep.subr.bf16.mxu0 0
        %1037 = vmatpush1.bf16.xpose.msra.mxu0 0
        %1038 = vmatprep.subr.bf16.mxu0 0
        %1039 = vmatpush1.bf16.xpose.msra.mxu0 0
        %1040 = vmatprep.subr.bf16.mxu0 0
        %1041 = vmatpush1.bf16.xpose.msra.mxu0 0
        %1042 = vmatprep.subr.bf16.mxu0 0
        %1043 = vmatpush1.bf16.xpose.msra.mxu0 0
        %1044 = vmatprep.subr.bf16.mxu0 0
        %1045 = vmatpush1.bf16.xpose.msra.mxu0 0
        %1046 = vmatprep.subr.bf16.mxu0 0
        %1047 = vmatpush1.bf16.xpose.msra.mxu0 0
        %1048 = vmatprep.subr.bf16.mxu0 0
        %1049 = vmatpush1.bf16.xpose.msra.mxu0 0
        %1050 = vmatprep.subr.bf16.mxu0 0
        %1051 = vmatpush1.bf16.xpose.msra.mxu0 0
        %1052 = vmatprep.subr.bf16.mxu0 0
        %1053 = vmatpush1.bf16.xpose.msra.mxu0 0
        %1054 = vmatprep.subr.bf16.mxu0 0
        %1055 = vmatpush1.bf16.xpose.msra.mxu0 0
        %1056 = vmatprep.subr.bf16.mxu0 0
        %1057 = vmatpush1.bf16.xpose.msra.mxu0 0
        %1058 = vmatprep.subr.bf16.mxu0 0
        %1059 = vmatpush1.bf16.xpose.msra.mxu0 0
        %1060 = vmatprep.subr.bf16.mxu0 0
        %1061 = vmatpush1.bf16.xpose.msra.mxu0 0
        %1062 = vmatprep.mubr.bf16.mxu0 0
        %1063 = vmatmul.mubr.bf16.gmra.mrb[0].mxu0 %v1025
        %v1064 = vpop.f32.mrb[0].mxu0
        %v1065 = vadd.f32 0.0, %v1064
        %v1066 = vpop.f32.mrb[0].mxu0
        %v1067 = vpop.f32.mrb[0].mxu0
        %v1068 = vpop.f32.mrb[0].mxu0
        %1069 = vdwg.mxu0
        %v1070 = vsel %vm957, %v1065, -inf
        %1071 = vmax.xlane.f32.xlu0 %v1070
        %v1072 = vpop.xlane.xlu0 %1071
        %v1073 = vsub.f32 %v1065, %v1072
        %v1074 = vmul.f32 %v1073, 1.442695
        %v1075 = vpow.pop %v1074
        %v1076 = vsel %vm957, %v1075, 0.0
        %1077 = vadd.xlane.f32.xlu0 %v1076
        %v1078 = vpop.xlane.xlu0 %1077
        %v1079 = vrcp.pop %v1078
        %v1080 = vmul.f32 %v1075, %v1079
        %v1081 = vpack.c.bf16 %v1080, %v1080
        %1083 = vrot.lane.b32.xlu0 %v909, 96
        %v1084 = vpop.permute.xlu0 %1083
        %v1087 = vsel %vm957, %v1081, 0
        %1089 = vmatprep.subr.bf16.mxu0 0
        %1090 = vmatpush1.bf16.msra.mxu0 %v1084
        %1091 = vmatprep.subr.bf16.mxu0 0
        %1092 = vmatpush1.bf16.msra.mxu0 0
        %1093 = vmatprep.subr.bf16.mxu0 0
        %1094 = vmatpush1.bf16.msra.mxu0 0
        %1095 = vmatprep.subr.bf16.mxu0 0
        %1096 = vmatpush1.bf16.msra.mxu0 0
        %1097 = vmatprep.subr.bf16.mxu0 0
        %1098 = vmatpush1.bf16.msra.mxu0 0
        %1099 = vmatprep.subr.bf16.mxu0 0
        %1100 = vmatpush1.bf16.msra.mxu0 0
        %1101 = vmatprep.subr.bf16.mxu0 0
        %1102 = vmatpush1.bf16.msra.mxu0 0
        %1103 = vmatprep.subr.bf16.mxu0 0
        %1104 = vmatpush1.bf16.msra.mxu0 0
        %1105 = vmatprep.subr.bf16.mxu0 0
        %1106 = vmatpush1.bf16.msra.mxu0 0
        %1107 = vmatprep.subr.bf16.mxu0 0
        %1108 = vmatpush1.bf16.msra.mxu0 0
        %1109 = vmatprep.subr.bf16.mxu0 0
        %1110 = vmatpush1.bf16.msra.mxu0 0
        %1111 = vmatprep.subr.bf16.mxu0 0
        %1112 = vmatpush1.bf16.msra.mxu0 0
        %1113 = vmatprep.subr.bf16.mxu0 0
        %1114 = vmatpush1.bf16.msra.mxu0 0
        %1115 = vmatprep.subr.bf16.mxu0 0
        %1116 = vmatpush1.bf16.msra.mxu0 0
        %1117 = vmatprep.subr.bf16.mxu0 0
        %1118 = vmatpush1.bf16.msra.mxu0 0
        %1119 = vmatprep.subr.bf16.mxu0 0
        %1120 = vmatpush1.bf16.msra.mxu0 0
        %1121 = vmatprep.mubr.bf16.mxu0 0
        %1122 = vmatmul.mubr.bf16.gmra.mrb[0].mxu0 %v1087
        %v1123 = vpop.f32.mrb[0].mxu0
        %v1124 = vadd.f32 0.0, %v1123
        %v1125 = vpop.f32.mrb[0].mxu0
        %v1126 = vpop.f32.mrb[0].mxu0
        %v1127 = vpop.f32.mrb[0].mxu0
        %1128 = vdwg.mxu0
        %v1129 = vld [vmem:[#allocation15 + $0x10] sm:$0xf]
        %v1130 = vld [vmem:[#allocation15 + $0x14] sm:$0xf]
        %v1131 = vld [vmem:[#allocation15 + $0x18] sm:$0xf]
        %v1132 = vld [vmem:[#allocation15 + $0x1c] sm:$0xf]
        %v1133 = vpack.c.bf16 %v1124, %v1124
        %v1138 = vunpack.c.l.b16 %v1129
        %v1139 = vunpack.c.l.b16 %v1130
        %v1140 = vunpack.c.l.b16 %v1131
        %v1141 = vunpack.c.l.b16 %v1132
        %v1142 = vpack.c.b16 %v1139, %v1138
        %v1143 = vpack.c.b16 %v1141, %v1140
        %v1147 = vsel %vm910, %v1133, 0
        %1149 = vmatprep.subr.bf16.mxu0 0
        %1150 = vmatpush1.bf16.msra.mxu0 %v1142
        %1151 = vmatprep.subr.bf16.mxu0 0
        %1152 = vmatpush1.bf16.msra.mxu0 %v1143
        %1153 = vmatprep.subr.bf16.mxu0 0
        %1154 = vmatpush1.bf16.msra.mxu0 0
        %1155 = vmatprep.subr.bf16.mxu0 0
        %1156 = vmatpush1.bf16.msra.mxu0 0
        %1157 = vmatprep.subr.bf16.mxu0 0
        %1158 = vmatpush1.bf16.msra.mxu0 0
        %1159 = vmatprep.subr.bf16.mxu0 0
        %1160 = vmatpush1.bf16.msra.mxu0 0
        %1161 = vmatprep.subr.bf16.mxu0 0
        %1162 = vmatpush1.bf16.msra.mxu0 0
        %1163 = vmatprep.subr.bf16.mxu0 0
        %1164 = vmatpush1.bf16.msra.mxu0 0
        %1165 = vmatprep.subr.bf16.mxu0 0
        %1166 = vmatpush1.bf16.msra.mxu0 0
        %1167 = vmatprep.subr.bf16.mxu0 0
        %1168 = vmatpush1.bf16.msra.mxu0 0
        %1169 = vmatprep.subr.bf16.mxu0 0
        %1170 = vmatpush1.bf16.msra.mxu0 0
        %1171 = vmatprep.subr.bf16.mxu0 0
        %1172 = vmatpush1.bf16.msra.mxu0 0
        %1173 = vmatprep.subr.bf16.mxu0 0
        %1174 = vmatpush1.bf16.msra.mxu0 0
        %1175 = vmatprep.subr.bf16.mxu0 0
        %1176 = vmatpush1.bf16.msra.mxu0 0
        %1177 = vmatprep.subr.bf16.mxu0 0
        %1178 = vmatpush1.bf16.msra.mxu0 0
        %1179 = vmatprep.subr.bf16.mxu0 0
        %1180 = vmatpush1.bf16.msra.mxu0 0
        %1181 = vmatprep.mubr.bf16.mxu0 0
        %1182 = vmatmul.mubr.bf16.gmra.mrb[0].mxu0 %v1147
        %v1183 = vpop.f32.mrb[0].mxu0
        %v1184 = vadd.f32 0.0, %v1183
        %v1185 = vpop.f32.mrb[0].mxu0
        %v1186 = vpop.f32.mrb[0].mxu0
        %v1187 = vpop.f32.mrb[0].mxu0
        %1188 = vdwg.mxu0
        %v1193 = vunpack.c.l.b16 %v1013
        %v1194 = vunpack.c.l.b16 %v1014
        %v1195 = vunpack.c.l.b16 %v1015
        %v1196 = vunpack.c.l.b16 %v1016
        %v1197 = vpack.c.b16 %v1194, %v1193
        %v1198 = vpack.c.b16 %v1196, %v1195
        %v1202 = vsel %vm910, %v1017, 0
        %1204 = vmatprep.subr.bf16.mxu0 0
        %1205 = vmatpush1.bf16.msra.mxu0 %v1197
        %1206 = vmatprep.subr.bf16.mxu0 0
        %1207 = vmatpush1.bf16.msra.mxu0 %v1198
        %1208 = vmatprep.subr.bf16.mxu0 0
        %1209 = vmatpush1.bf16.msra.mxu0 0
        %1210 = vmatprep.subr.bf16.mxu0 0
        %1211 = vmatpush1.bf16.msra.mxu0 0
        %1212 = vmatprep.subr.bf16.mxu0 0
        %1213 = vmatpush1.bf16.msra.mxu0 0
        %1214 = vmatprep.subr.bf16.mxu0 0
        %1215 = vmatpush1.bf16.msra.mxu0 0
        %1216 = vmatprep.subr.bf16.mxu0 0
        %1217 = vmatpush1.bf16.msra.mxu0 0
        %1218 = vmatprep.subr.bf16.mxu0 0
        %1219 = vmatpush1.bf16.msra.mxu0 0
        %1220 = vmatprep.subr.bf16.mxu0 0
        %1221 = vmatpush1.bf16.msra.mxu0 0
        %1222 = vmatprep.subr.bf16.mxu0 0
        %1223 = vmatpush1.bf16.msra.mxu0 0
        %1224 = vmatprep.subr.bf16.mxu0 0
        %1225 = vmatpush1.bf16.msra.mxu0 0
        %1226 = vmatprep.subr.bf16.mxu0 0
        %1227 = vmatpush1.bf16.msra.mxu0 0
        %1228 = vmatprep.subr.bf16.mxu0 0
        %1229 = vmatpush1.bf16.msra.mxu0 0
        %1230 = vmatprep.subr.bf16.mxu0 0
        %1231 = vmatpush1.bf16.msra.mxu0 0
        %1232 = vmatprep.subr.bf16.mxu0 0
        %1233 = vmatpush1.bf16.msra.mxu0 0
        %1234 = vmatprep.subr.bf16.mxu0 0
        %1235 = vmatpush1.bf16.msra.mxu0 0
        %1236 = vmatprep.mubr.bf16.mxu0 0
        %1237 = vmatmul.mubr.bf16.gmra.mrb[0].mxu0 %v1202
        %v1238 = vpop.f32.mrb[0].mxu0
        %v1239 = vadd.f32 %v1184, %v1238
        %v1240 = vpop.f32.mrb[0].mxu0
        %v1241 = vpop.f32.mrb[0].mxu0
        %v1242 = vpop.f32.mrb[0].mxu0
        %1243 = vdwg.mxu0
        %1244 = vrot.lane.b32.xlu0 %v907, 64
        %v1245 = vpop.permute.xlu0 %1244
        %1246 = vrot.lane.b32.xlu0 %v908, 64
        %v1247 = vpop.permute.xlu0 %1246
        %v1249 = vsel %vm910, %v1245, 0
        %v1252 = vsel %vm910, %v1247, 0
        %1254 = vmatprep.subr.bf16.mxu0 0
        %1255 = vmatpush1.bf16.xpose.msra.mxu0 %v1252
        %1256 = vmatprep.subr.bf16.mxu0 0
        %1257 = vmatpush1.bf16.xpose.msra.mxu0 0
        %1258 = vmatprep.subr.bf16.mxu0 0
        %1259 = vmatpush1.bf16.xpose.msra.mxu0 0
        %1260 = vmatprep.subr.bf16.mxu0 0
        %1261 = vmatpush1.bf16.xpose.msra.mxu0 0
        %1262 = vmatprep.subr.bf16.mxu0 0
        %1263 = vmatpush1.bf16.xpose.msra.mxu0 0
        %1264 = vmatprep.subr.bf16.mxu0 0
        %1265 = vmatpush1.bf16.xpose.msra.mxu0 0
        %1266 = vmatprep.subr.bf16.mxu0 0
        %1267 = vmatpush1.bf16.xpose.msra.mxu0 0
        %1268 = vmatprep.subr.bf16.mxu0 0
        %1269 = vmatpush1.bf16.xpose.msra.mxu0 0
        %1270 = vmatprep.subr.bf16.mxu0 0
        %1271 = vmatpush1.bf16.xpose.msra.mxu0 0
        %1272 = vmatprep.subr.bf16.mxu0 0
        %1273 = vmatpush1.bf16.xpose.msra.mxu0 0
        %1274 = vmatprep.subr.bf16.mxu0 0
        %1275 = vmatpush1.bf16.xpose.msra.mxu0 0
        %1276 = vmatprep.subr.bf16.mxu0 0
        %1277 = vmatpush1.bf16.xpose.msra.mxu0 0
        %1278 = vmatprep.subr.bf16.mxu0 0
        %1279 = vmatpush1.bf16.xpose.msra.mxu0 0
        %1280 = vmatprep.subr.bf16.mxu0 0
        %1281 = vmatpush1.bf16.xpose.msra.mxu0 0
        %1282 = vmatprep.subr.bf16.mxu0 0
        %1283 = vmatpush1.bf16.xpose.msra.mxu0 0
        %1284 = vmatprep.subr.bf16.mxu0 0
        %1285 = vmatpush1.bf16.xpose.msra.mxu0 0
        %1286 = vmatprep.mubr.bf16.mxu0 0
        %1287 = vmatmul.mubr.bf16.gmra.mrb[0].mxu0 %v1249
        %v1288 = vpop.f32.mrb[0].mxu0
        %v1289 = vadd.f32 0.0, %v1288
        %v1290 = vpop.f32.mrb[0].mxu0
        %v1291 = vpop.f32.mrb[0].mxu0
        %v1292 = vpop.f32.mrb[0].mxu0
        %1293 = vdwg.mxu0
        %v1294 = vsel %vm957, %v1289, -inf
        %1295 = vmax.xlane.f32.xlu0 %v1294
        %v1296 = vpop.xlane.xlu0 %1295
        %v1297 = vsub.f32 %v1289, %v1296
        %v1298 = vmul.f32 %v1297, 1.442695
        %v1299 = vpow.pop %v1298
        %v1300 = vsel %vm957, %v1299, 0.0
        %1301 = vadd.xlane.f32.xlu0 %v1300
        %v1302 = vpop.xlane.xlu0 %1301
        %v1303 = vrcp.pop %v1302
        %v1304 = vmul.f32 %v1299, %v1303
        %v1305 = vpack.c.bf16 %v1304, %v1304
        %1306 = vrot.lane.b32.xlu0 %v909, 64
        %v1307 = vpop.permute.xlu0 %1306
        %v1310 = vsel %vm957, %v1305, 0
        %1312 = vmatprep.subr.bf16.mxu0 0
        %1313 = vmatpush1.bf16.msra.mxu0 %v1307
        %1314 = vmatprep.subr.bf16.mxu0 0
        %1315 = vmatpush1.bf16.msra.mxu0 0
        %1316 = vmatprep.subr.bf16.mxu0 0
        %1317 = vmatpush1.bf16.msra.mxu0 0
        %1318 = vmatprep.subr.bf16.mxu0 0
        %1319 = vmatpush1.bf16.msra.mxu0 0
        %1320 = vmatprep.subr.bf16.mxu0 0
        %1321 = vmatpush1.bf16.msra.mxu0 0
        %1322 = vmatprep.subr.bf16.mxu0 0
        %1323 = vmatpush1.bf16.msra.mxu0 0
        %1324 = vmatprep.subr.bf16.mxu0 0
        %1325 = vmatpush1.bf16.msra.mxu0 0
        %1326 = vmatprep.subr.bf16.mxu0 0
        %1327 = vmatpush1.bf16.msra.mxu0 0
        %1328 = vmatprep.subr.bf16.mxu0 0
        %1329 = vmatpush1.bf16.msra.mxu0 0
        %1330 = vmatprep.subr.bf16.mxu0 0
        %1331 = vmatpush1.bf16.msra.mxu0 0
        %1332 = vmatprep.subr.bf16.mxu0 0
        %1333 = vmatpush1.bf16.msra.mxu0 0
        %1334 = vmatprep.subr.bf16.mxu0 0
        %1335 = vmatpush1.bf16.msra.mxu0 0
        %1336 = vmatprep.subr.bf16.mxu0 0
        %1337 = vmatpush1.bf16.msra.mxu0 0
        %1338 = vmatprep.subr.bf16.mxu0 0
        %1339 = vmatpush1.bf16.msra.mxu0 0
        %1340 = vmatprep.subr.bf16.mxu0 0
        %1341 = vmatpush1.bf16.msra.mxu0 0
        %1342 = vmatprep.subr.bf16.mxu0 0
        %1343 = vmatpush1.bf16.msra.mxu0 0
        %1344 = vmatprep.mubr.bf16.mxu0 0
        %1345 = vmatmul.mubr.bf16.gmra.mrb[0].mxu0 %v1310
        %v1346 = vpop.f32.mrb[0].mxu0
        %v1347 = vadd.f32 0.0, %v1346
        %v1348 = vpop.f32.mrb[0].mxu0
        %v1349 = vpop.f32.mrb[0].mxu0
        %v1350 = vpop.f32.mrb[0].mxu0
        %1351 = vdwg.mxu0
        %v1352 = vld [vmem:[#allocation15 + $0x20] sm:$0xf]
        %v1353 = vld [vmem:[#allocation15 + $0x24] sm:$0xf]
        %v1354 = vld [vmem:[#allocation15 + $0x28] sm:$0xf]
        %v1355 = vld [vmem:[#allocation15 + $0x2c] sm:$0xf]
        %v1356 = vpack.c.bf16 %v1347, %v1347
        %v1361 = vunpack.c.l.b16 %v1352
        %v1362 = vunpack.c.l.b16 %v1353
        %v1363 = vunpack.c.l.b16 %v1354
        %v1364 = vunpack.c.l.b16 %v1355
        %v1365 = vpack.c.b16 %v1362, %v1361
        %v1366 = vpack.c.b16 %v1364, %v1363
        %v1370 = vsel %vm910, %v1356, 0
        %1372 = vmatprep.subr.bf16.mxu0 0
        %1373 = vmatpush1.bf16.msra.mxu0 %v1365
        %1374 = vmatprep.subr.bf16.mxu0 0
        %1375 = vmatpush1.bf16.msra.mxu0 %v1366
        %1376 = vmatprep.subr.bf16.mxu0 0
        %1377 = vmatpush1.bf16.msra.mxu0 0
        %1378 = vmatprep.subr.bf16.mxu0 0
        %1379 = vmatpush1.bf16.msra.mxu0 0
        %1380 = vmatprep.subr.bf16.mxu0 0
        %1381 = vmatpush1.bf16.msra.mxu0 0
        %1382 = vmatprep.subr.bf16.mxu0 0
        %1383 = vmatpush1.bf16.msra.mxu0 0
        %1384 = vmatprep.subr.bf16.mxu0 0
        %1385 = vmatpush1.bf16.msra.mxu0 0
        %1386 = vmatprep.subr.bf16.mxu0 0
        %1387 = vmatpush1.bf16.msra.mxu0 0
        %1388 = vmatprep.subr.bf16.mxu0 0
        %1389 = vmatpush1.bf16.msra.mxu0 0
        %1390 = vmatprep.subr.bf16.mxu0 0
        %1391 = vmatpush1.bf16.msra.mxu0 0
        %1392 = vmatprep.subr.bf16.mxu0 0
        %1393 = vmatpush1.bf16.msra.mxu0 0
        %1394 = vmatprep.subr.bf16.mxu0 0
        %1395 = vmatpush1.bf16.msra.mxu0 0
        %1396 = vmatprep.subr.bf16.mxu0 0
        %1397 = vmatpush1.bf16.msra.mxu0 0
        %1398 = vmatprep.subr.bf16.mxu0 0
        %1399 = vmatpush1.bf16.msra.mxu0 0
        %1400 = vmatprep.subr.bf16.mxu0 0
        %1401 = vmatpush1.bf16.msra.mxu0 0
        %1402 = vmatprep.subr.bf16.mxu0 0
        %1403 = vmatpush1.bf16.msra.mxu0 0
        %1404 = vmatprep.mubr.bf16.mxu0 0
        %1405 = vmatmul.mubr.bf16.gmra.mrb[0].mxu0 %v1370
        %v1406 = vpop.f32.mrb[0].mxu0
        %v1407 = vadd.f32 0.0, %v1406
        %v1408 = vpop.f32.mrb[0].mxu0
        %v1409 = vpop.f32.mrb[0].mxu0
        %v1410 = vpop.f32.mrb[0].mxu0
        %1411 = vdwg.mxu0
        %v1412 = vadd.f32 %v1239, %v1407
        %1413 = vrot.lane.b32.xlu0 %v907, 32
        %v1414 = vpop.permute.xlu0 %1413
        %1415 = vrot.lane.b32.xlu0 %v908, 32
        %v1416 = vpop.permute.xlu0 %1415
        %v1418 = vsel %vm910, %v1414, 0
        %v1421 = vsel %vm910, %v1416, 0
        %1423 = vmatprep.subr.bf16.mxu0 0
        %1424 = vmatpush1.bf16.xpose.msra.mxu0 %v1421
        %1425 = vmatprep.subr.bf16.mxu0 0
        %1426 = vmatpush1.bf16.xpose.msra.mxu0 0
        %1427 = vmatprep.subr.bf16.mxu0 0
        %1428 = vmatpush1.bf16.xpose.msra.mxu0 0
        %1429 = vmatprep.subr.bf16.mxu0 0
        %1430 = vmatpush1.bf16.xpose.msra.mxu0 0
        %1431 = vmatprep.subr.bf16.mxu0 0
        %1432 = vmatpush1.bf16.xpose.msra.mxu0 0
        %1433 = vmatprep.subr.bf16.mxu0 0
        %1434 = vmatpush1.bf16.xpose.msra.mxu0 0
        %1435 = vmatprep.subr.bf16.mxu0 0
        %1436 = vmatpush1.bf16.xpose.msra.mxu0 0
        %1437 = vmatprep.subr.bf16.mxu0 0
        %1438 = vmatpush1.bf16.xpose.msra.mxu0 0
        %1439 = vmatprep.subr.bf16.mxu0 0
        %1440 = vmatpush1.bf16.xpose.msra.mxu0 0
        %1441 = vmatprep.subr.bf16.mxu0 0
        %1442 = vmatpush1.bf16.xpose.msra.mxu0 0
        %1443 = vmatprep.subr.bf16.mxu0 0
        %1444 = vmatpush1.bf16.xpose.msra.mxu0 0
        %1445 = vmatprep.subr.bf16.mxu0 0
        %1446 = vmatpush1.bf16.xpose.msra.mxu0 0
        %1447 = vmatprep.subr.bf16.mxu0 0
        %1448 = vmatpush1.bf16.xpose.msra.mxu0 0
        %1449 = vmatprep.subr.bf16.mxu0 0
        %1450 = vmatpush1.bf16.xpose.msra.mxu0 0
        %1451 = vmatprep.subr.bf16.mxu0 0
        %1452 = vmatpush1.bf16.xpose.msra.mxu0 0
        %1453 = vmatprep.subr.bf16.mxu0 0
        %1454 = vmatpush1.bf16.xpose.msra.mxu0 0
        %1455 = vmatprep.mubr.bf16.mxu0 0
        %1456 = vmatmul.mubr.bf16.gmra.mrb[0].mxu0 %v1418
        %v1457 = vpop.f32.mrb[0].mxu0
        %v1458 = vadd.f32 0.0, %v1457
        %v1459 = vpop.f32.mrb[0].mxu0
        %v1460 = vpop.f32.mrb[0].mxu0
        %v1461 = vpop.f32.mrb[0].mxu0
        %1462 = vdwg.mxu0
        %v1463 = vsel %vm957, %v1458, -inf
        %1464 = vmax.xlane.f32.xlu0 %v1463
        %v1465 = vpop.xlane.xlu0 %1464
        %v1466 = vsub.f32 %v1458, %v1465
        %v1467 = vmul.f32 %v1466, 1.442695
        %v1468 = vpow.pop %v1467
        %v1469 = vsel %vm957, %v1468, 0.0
        %1470 = vadd.xlane.f32.xlu0 %v1469
        %v1471 = vpop.xlane.xlu0 %1470
        %v1472 = vrcp.pop %v1471
        %v1473 = vmul.f32 %v1468, %v1472
        %v1474 = vpack.c.bf16 %v1473, %v1473
        %1475 = vrot.lane.b32.xlu0 %v909, 32
        %v1476 = vpop.permute.xlu0 %1475
        %v1479 = vsel %vm957, %v1474, 0
        %1481 = vmatprep.subr.bf16.mxu0 0
        %1482 = vmatpush1.bf16.msra.mxu0 %v1476
        %1483 = vmatprep.subr.bf16.mxu0 0
        %1484 = vmatpush1.bf16.msra.mxu0 0
        %1485 = vmatprep.subr.bf16.mxu0 0
        %1486 = vmatpush1.bf16.msra.mxu0 0
        %1487 = vmatprep.subr.bf16.mxu0 0
        %1488 = vmatpush1.bf16.msra.mxu0 0
        %1489 = vmatprep.subr.bf16.mxu0 0
        %1490 = vmatpush1.bf16.msra.mxu0 0
        %1491 = vmatprep.subr.bf16.mxu0 0
        %1492 = vmatpush1.bf16.msra.mxu0 0
        %1493 = vmatprep.subr.bf16.mxu0 0
        %1494 = vmatpush1.bf16.msra.mxu0 0
        %1495 = vmatprep.subr.bf16.mxu0 0
        %1496 = vmatpush1.bf16.msra.mxu0 0
        %1497 = vmatprep.subr.bf16.mxu0 0
        %1498 = vmatpush1.bf16.msra.mxu0 0
        %1499 = vmatprep.subr.bf16.mxu0 0
        %1500 = vmatpush1.bf16.msra.mxu0 0
        %1501 = vmatprep.subr.bf16.mxu0 0
        %1502 = vmatpush1.bf16.msra.mxu0 0
        %1503 = vmatprep.subr.bf16.mxu0 0
        %1504 = vmatpush1.bf16.msra.mxu0 0
        %1505 = vmatprep.subr.bf16.mxu0 0
        %1506 = vmatpush1.bf16.msra.mxu0 0
        %1507 = vmatprep.subr.bf16.mxu0 0
        %1508 = vmatpush1.bf16.msra.mxu0 0
        %1509 = vmatprep.subr.bf16.mxu0 0
        %1510 = vmatpush1.bf16.msra.mxu0 0
        %1511 = vmatprep.subr.bf16.mxu0 0
        %1512 = vmatpush1.bf16.msra.mxu0 0
        %1513 = vmatprep.mubr.bf16.mxu0 0
        %1514 = vmatmul.mubr.bf16.gmra.mrb[0].mxu0 %v1479
        %v1515 = vpop.f32.mrb[0].mxu0
        %v1516 = vadd.f32 0.0, %v1515
        %v1517 = vpop.f32.mrb[0].mxu0
        %v1518 = vpop.f32.mrb[0].mxu0
        %v1519 = vpop.f32.mrb[0].mxu0
        %1520 = vdwg.mxu0
        %v1521 = vld [vmem:[#allocation15 + $0x30] sm:$0xf]
        %v1522 = vld [vmem:[#allocation15 + $0x34] sm:$0xf]
        %v1523 = vld [vmem:[#allocation15 + $0x38] sm:$0xf]
        %v1524 = vld [vmem:[#allocation15 + $0x3c] sm:$0xf]
        %v1525 = vpack.c.bf16 %v1516, %v1516
        %v1530 = vunpack.c.l.b16 %v1521
        %v1531 = vunpack.c.l.b16 %v1522
        %v1532 = vunpack.c.l.b16 %v1523
        %v1533 = vunpack.c.l.b16 %v1524
        %v1534 = vpack.c.b16 %v1531, %v1530
        %v1535 = vpack.c.b16 %v1533, %v1532
        %v1539 = vsel %vm910, %v1525, 0
        %1541 = vmatprep.subr.bf16.mxu0 0
        %1542 = vmatpush1.bf16.msra.mxu0 %v1534
        %1543 = vmatprep.subr.bf16.mxu0 0
        %1544 = vmatpush1.bf16.msra.mxu0 %v1535
        %1545 = vmatprep.subr.bf16.mxu0 0
        %1546 = vmatpush1.bf16.msra.mxu0 0
        %1547 = vmatprep.subr.bf16.mxu0 0
        %1548 = vmatpush1.bf16.msra.mxu0 0
        %1549 = vmatprep.subr.bf16.mxu0 0
        %1550 = vmatpush1.bf16.msra.mxu0 0
        %1551 = vmatprep.subr.bf16.mxu0 0
        %1552 = vmatpush1.bf16.msra.mxu0 0
        %1553 = vmatprep.subr.bf16.mxu0 0
        %1554 = vmatpush1.bf16.msra.mxu0 0
        %1555 = vmatprep.subr.bf16.mxu0 0
        %1556 = vmatpush1.bf16.msra.mxu0 0
        %1557 = vmatprep.subr.bf16.mxu0 0
        %1558 = vmatpush1.bf16.msra.mxu0 0
        %1559 = vmatprep.subr.bf16.mxu0 0
        %1560 = vmatpush1.bf16.msra.mxu0 0
        %1561 = vmatprep.subr.bf16.mxu0 0
        %1562 = vmatpush1.bf16.msra.mxu0 0
        %1563 = vmatprep.subr.bf16.mxu0 0
        %1564 = vmatpush1.bf16.msra.mxu0 0
        %1565 = vmatprep.subr.bf16.mxu0 0
        %1566 = vmatpush1.bf16.msra.mxu0 0
        %1567 = vmatprep.subr.bf16.mxu0 0
        %1568 = vmatpush1.bf16.msra.mxu0 0
        %1569 = vmatprep.subr.bf16.mxu0 0
        %1570 = vmatpush1.bf16.msra.mxu0 0
        %1571 = vmatprep.subr.bf16.mxu0 0
        %1572 = vmatpush1.bf16.msra.mxu0 0
        %1573 = vmatprep.mubr.bf16.mxu0 0
        %1574 = vmatmul.mubr.bf16.gmra.mrb[0].mxu0 %v1539
        %v1575 = vpop.f32.mrb[0].mxu0
        %v1576 = vadd.f32 0.0, %v1575
        %v1577 = vpop.f32.mrb[0].mxu0
        %v1578 = vpop.f32.mrb[0].mxu0
        %v1579 = vpop.f32.mrb[0].mxu0
        %1580 = vdwg.mxu0
        %v1581 = vadd.f32 %v1412, %v1576
        %v1582 = vld [vmem:[%s10] sm:$0x1]
        %v1584 = vlaneseq
        %v1585 = vshrl.u32 %v1584, 7
        %v1586 = vsub.s32 0, %v1585
        %v1587 = vrot.slane %v1582, %v1586
        %v1589 = vadd.f32 %v1581, %v1587
        %1590 = vst [vmem:[%s554] sm:$0xff] %v1589
        %s1591 = sand.u32 %s303, 1
        %s1592 = scalar_lea.sflag [#allocation6], %s1591
        %s1593 = sand.u32 %s303, 1
        %s1594 = smul.addr %s1593, 8
        %s1595 = scalar_lea.vmem [#allocation16], %s1594
        // Predicated region
        $region97: #{tpu_custom_call.1} parent=63 // pred_check
          %p1596 = pneg %p313
        $region98: #{tpu_custom_call.1} parent=63 // pred_check_branch
          %1598 = sbr.rel (%p1596) target = $region100
        $region99: #{tpu_custom_call.1} parent=63 // pred_region
          %s1600 = ssub.s32 128, 128
          %1601 = vsyncadd %s1592, %s1600
          %s1602 = smul.addr %s37, 2
          %s1603 = sadd.s32 %s38, %s1602
          %s1604 = smul.addr %s1603, 128
          %s1605 = scalar_lea.hbm %s11, %s1604
          %s1607 = sshll.u32 %s1595, 4
          %s1608 = int_to_ptr.vmem [resolvable:$true] %s1607
          %1610 = dma.vmem_to_hbm [thread:$0]  %s1608, 128, %s1605, %s1592
        $region100: #{tpu_custom_call.1} parent=63 // pred_fallthru
          _
      $region64: #{tpu_custom_call.1} parent=5 // pred_fallthru
        _
      %p1611 = scmp.le.s32.totalorder 2, %s28
      // Predicated region
      $region101: #{tpu_custom_call.1} parent=5 // pred_check
        %p1612 = pneg %p1611
      $region102: #{tpu_custom_call.1} parent=5 // pred_check_branch
        %1614 = sbr.rel (%p1612) target = $region104
      $region103: #{tpu_custom_call.1} parent=5 // pred_region
        %s1615 = ssub.s32 %s28, 2
        // Predicated region
        $region105: #{tpu_custom_call.1} parent=103 // pred_check
          %p1616 = pneg %p319
        $region106: #{tpu_custom_call.1} parent=103 // pred_check_branch
          %1618 = sbr.rel (%p1616) target = $region108
        $region107: #{tpu_custom_call.1} parent=103 // pred_region
          %s1619 = sand.u32 %s304, 1
          %s1620 = scalar_lea.sflag [#allocation6], %s1619
          %s1621 = sand.u32 %s304, 1
          %s1622 = smul.addr %s1621, 8
          %s1623 = scalar_lea.vmem [#allocation16], %s1622
          %1624 = dma.done %s1620, 128
        $region108: #{tpu_custom_call.1} parent=103 // pred_fallthru
          _
      $region104: #{tpu_custom_call.1} parent=5 // pred_fallthru
        _
    $region6: #{tpu_custom_call.1} parent=1 // loop_footer
      %s32 = sadd.s32 1, %s28
    $region7: #{tpu_custom_call.1} parent=1 // loop_footer_branch
      %27 = sbr.rel target = $region3
    $region8: #{tpu_custom_call.1} parent=1 // loop_exit
      _
    %1625 = vsyncpa [#allocation5], 1
    %s1626 = scalar_lea.sflag [#allocation5], 1
    %1627 = vsyncpa %s1626, 1
    %1628 = vsyncpa [#allocation8], 1
    %s1629 = scalar_lea.sflag [#allocation8], 1
    %1630 = vsyncpa %s1629, 1
    %1631 = vsyncpa [#allocation11], 1
    %1632 = vsyncpa [#allocation14], 1
    %1633 = vsyncpa [#allocation6], 1
    %s1634 = scalar_lea.sflag [#allocation6], 1
    %1635 = vsyncpa %s1634, 1

</llo_original>
